<compile_context>
chip_gen: v6e
topology: v6e:2x2x1
jax: 0.10.0
libtpu: 0.0.40
codegen_flags: <defaults>
</compile_context>

<pallas_src>
import jax
import jax.numpy as jnp
from jax.experimental import pallas as pl
from jax.experimental.pallas import tpu as pltpu


# ---------------------------------------------------------------------------
# Kernel 1: fused conv stack: 3 x [Conv1d(k=3, pad=1) + bias + ReLU + MaxPool1d(2, 2)]
# ---------------------------------------------------------------------------
def _conv_block(x, w_ref, b_ref):
    """One Conv1d(k=3, pad=1) + bias + ReLU + MaxPool1d(2,2) on an (L, Cin) slab.

    The conv is three shifted MXU matmuls accumulated in f32 (taps k=0/1/2); shifted
    operands are built as values with zero halo rows, so there is no im2col scratch
    buffer and no masked sub-lane stores.
    """
    L, C = x.shape
    cout = w_ref.shape[2]
    zero = jnp.zeros((1, C), x.dtype)
    x_prev = jnp.concatenate([zero, x[:L - 1, :]], axis=0)   # x[i-1], zero halo at i=0
    x_next = jnp.concatenate([x[1:, :], zero], axis=0)       # x[i+1], zero halo at i=L-1

    y = jnp.dot(x_prev, w_ref[0], preferred_element_type=jnp.float32)
    y = y + jnp.dot(x, w_ref[1], preferred_element_type=jnp.float32)
    y = y + jnp.dot(x_next, w_ref[2], preferred_element_type=jnp.float32)
    y = jnp.maximum(y + b_ref[...], 0.0)                     # bias + ReLU

    lh = L // 2                                              # floor == nn.MaxPool1d(2,2)
    return y[:2 * lh].reshape(lh, 2, cout).max(axis=1)


def fused_conv_kernel(x_ref, w1_ref, b1_ref, w2_ref, b2_ref, w3_ref, b3_ref, o_ref):
    # x_ref: (1, L, Cin) for one batch element; inter-layer activations never leave
    # VMEM/vregs. Output is written in bf16 (it feeds the bf16 fc1 contraction).
    y = _conv_block(x_ref[0].astype(jnp.float32), w1_ref, b1_ref)   # (L/2, 32)
    y = _conv_block(y, w2_ref, b2_ref)                              # (L/4, 64)
    y = _conv_block(y, w3_ref, b3_ref)                              # (L/8, 128)
    o_ref[0] = y.astype(o_ref.dtype)


def fused_conv_stack(x_nlc, params):
    """x_nlc: (B, L, Cin) channels-last. Returns (B, L3, 128) bf16 pooled conv3 features."""
    B, L, Cin = x_nlc.shape
    w1, w2, w3 = params["w1"], params["w2"], params["w3"]
    b1, b2, b3 = params["b1"], params["b2"], params["b3"]
    c3 = w3.shape[2]
    L3 = ((L // 2) // 2) // 2                                # floor pooling works for any L

    return pl.pallas_call(
        fused_conv_kernel,
        out_shape=jax.ShapeDtypeStruct((B, L3, c3), jnp.bfloat16),
        grid=(B,),
        in_specs=[
            pl.BlockSpec((1, L, Cin), lambda i: (i, 0, 0)),
            pl.BlockSpec(w1.shape, lambda i: (0, 0, 0)),
            pl.BlockSpec(b1.shape, lambda i: (0, 0)),
            pl.BlockSpec(w2.shape, lambda i: (0, 0, 0)),
            pl.BlockSpec(b2.shape, lambda i: (0, 0)),
            pl.BlockSpec(w3.shape, lambda i: (0, 0, 0)),
            pl.BlockSpec(b3.shape, lambda i: (0, 0)),
        ],
        out_specs=pl.BlockSpec((1, L3, c3), lambda i: (i, 0, 0)),
        compiler_params=pltpu.CompilerParams(
            dimension_semantics=("parallel",),
            vmem_limit_bytes=32 * 1024 * 1024,               # v5e headroom at L=7500
        ),
    )(x_nlc, w1, b1, w2, b2, w3, b3)


# ---------------------------------------------------------------------------
# Kernel 2: MLP head. fc1 K-tiled ("arbitrary" axis, f32 VMEM accumulator) with a leading
# "parallel" axis over two hidden-column halves (both v7x TensorCores stream fc1_w).
# fc1-bias + ReLU + fc2 are fused into the finalize step; the two partial logits are
# summed (and fc2 bias added) in a tiny wrapper epilogue.
# ---------------------------------------------------------------------------
def mlp_kernel(x_ref, w1_ref, b1_ref, w2_ref, o_ref, acc_ref):
    k = pl.program_id(1)

    @pl.when(k == 0)
    def _init():
        acc_ref[...] = jnp.zeros_like(acc_ref)

    # bf16 x bf16 MXU matmul, f32 accumulation in VMEM scratch.
    acc_ref[...] += jnp.dot(x_ref[...], w1_ref[0], preferred_element_type=jnp.float32)

    @pl.when(k == pl.num_programs(1) - 1)
    def _finalize():
        h = jnp.maximum(acc_ref[...] + b1_ref[0], 0.0)       # fc1 bias + ReLU (this half)
        o_ref[0] = jnp.dot(h, w2_ref[0], preferred_element_type=jnp.float32)


def mlp_head(flat, params):
    """flat: (B, K) bf16 in kernel flatten order. Returns (B, num_classes) f32 logits."""
    B, K = flat.shape
    assert K == params["K"], (K, params["K"])
    K_pad, block_k = params["K_pad"], params["block_k"]
    w1, b1, w2, b2 = params["fc1_w"], params["fc1_b"], params["fc2_w"], params["fc2_b"]
    n_split, _, h_half = w1.shape
    n_cls = w2.shape[-1]

    # Pad the tiny batch to 8 sublanes and K up to a multiple of block_k; the padded fc1_w
    # rows are zero, so the padded activation columns contribute nothing.
    B_pad = max(8, -(-B // 8) * 8)
    x = flat
    if B_pad != B or K_pad != K:
        x = jnp.pad(x, ((0, B_pad - B), (0, K_pad - K)))
    grid_k = K_pad // block_k

    partial = pl.pallas_call(
        mlp_kernel,
        out_shape=jax.ShapeDtypeStruct((n_split, B_pad, n_cls), jnp.float32),
        grid=(n_split, grid_k),
        in_specs=[
            pl.BlockSpec((B_pad, block_k), lambda j, k: (0, k)),
            pl.BlockSpec((1, block_k, h_half), lambda j, k: (j, k, 0)),
            pl.BlockSpec((1, 1, h_half), lambda j, k: (j, 0, 0)),
            pl.BlockSpec((1, h_half, n_cls), lambda j, k: (j, 0, 0)),
        ],
        out_specs=pl.BlockSpec((1, B_pad, n_cls), lambda j, k: (j, 0, 0)),
        scratch_shapes=[pltpu.VMEM((B_pad, h_half), jnp.float32)],
        compiler_params=pltpu.CompilerParams(
            dimension_semantics=("parallel", "arbitrary"),
            vmem_limit_bytes=32 * 1024 * 1024,
        ),
    )(x, w1, b1, w2)

    # Tiny epilogue: combine the two hidden-half partial logits and add the fc2 bias.
    return partial.sum(axis=0)[:B] + b2


# ---------------------------------------------------------------------------
# One-time parameter preparation (PyTorch layouts -> kernel layouts)
# ---------------------------------------------------------------------------
def prepare_params(tp, *, block_k=8192):
    """Convert PyTorch-layout parameters into the layouts the Pallas kernels use.

    - conv weights (Cout, Cin, 3) -> per-tap (3, Cin, Cout); biases -> (1, Cout).
    - fc1 weight rows are permuted from PyTorch's channel-major flatten order (c*L3 + l)
      to the conv kernel's natural (l*128 + c) order, zero-padded along K to a multiple
      of block_k, cast to bf16, and pre-split into hidden-column halves.
    """
    p = {}
    for i in (1, 2, 3):
        p[f"w{i}"] = jnp.transpose(tp[f"conv{i}_w"], (2, 1, 0))
        p[f"b{i}"] = tp[f"conv{i}_b"].reshape(1, -1)

    fw = tp["fc1_w"]                        # nn.Linear weight: (hidden, flatten_size)
    hidden = fw.shape[0]
    C3 = p["w3"].shape[2]                   # 128 conv3 output channels
    L3 = fw.shape[1] // C3
    K = C3 * L3

    block_k = max(128, (block_k // 128) * 128)
    block_k = min(block_k, -(-K // 128) * 128)
    K_pad = -(-K // block_k) * block_k

    wk = fw.T.reshape(C3, L3, hidden)                          # [c, l, h]
    wk = jnp.transpose(wk, (1, 0, 2)).reshape(K, hidden)       # row index = l*C3 + c
    wk = jnp.pad(wk, ((0, K_pad - K), (0, 0)))

    n_split = 2 if hidden % 2 == 0 else 1
    h_half = hidden // n_split
    wk = wk.reshape(K_pad, n_split, h_half)
    p["fc1_w"] = jnp.transpose(wk, (1, 0, 2)).astype(jnp.bfloat16)   # (n_split, K_pad, h_half)
    p["fc1_b"] = tp["fc1_b"].reshape(n_split, 1, h_half)
    p["fc2_w"] = tp["fc2_w"].T.reshape(n_split, h_half, -1)          # (n_split, h_half, n_cls)
    p["fc2_b"] = tp["fc2_b"]
    p["K"], p["K_pad"], p["block_k"] = K, K_pad, block_k
    return p


# ---------------------------------------------------------------------------
# Full forward, matching SimpleCNN1D.forward
# ---------------------------------------------------------------------------
def simple_cnn1d_forward(x_ncw, params):
    # x_ncw: (B, Cin, L), PyTorch NCW input.
    x_nlc = jnp.transpose(x_ncw, (0, 2, 1))           # cheap input-only transpose (Cin=4)
    feats = fused_conv_stack(x_nlc, params)           # (B, L3, 128) bf16, one fused kernel
    flat = feats.reshape(feats.shape[0], -1)          # contiguous reshape; no feature transpose
    return mlp_head(flat, params)


# Pure-JAX/XLA reference mirroring nn.Module semantics (lax.conv + floor max-pool); the fc1
# matmul applies the same bf16-weights/bf16-activations/f32-accumulation contract as the kernel.
def reference_forward(x_ncw, tp):
    def conv_relu_pool(x, w, b):
        y = jax.lax.conv_general_dilated(
            x, w, window_strides=(1,), padding=((1, 1),),
            dimension_numbers=("NCH", "OIH", "NCH"))
        y = jnp.maximum(y + b[None, :, None], 0.0)
        lh = y.shape[-1] // 2
        return y[..., :2 * lh].reshape(y.shape[0], y.shape[1], lh, 2).max(axis=-1)

    x = conv_relu_pool(x_ncw, tp["conv1_w"], tp["conv1_b"])
    x = conv_relu_pool(x, tp["conv2_w"], tp["conv2_b"])
    x = conv_relu_pool(x, tp["conv3_w"], tp["conv3_b"])
    flat = x.reshape(x.shape[0], -1)                   # PyTorch channel-major flatten
    h = jnp.dot(flat.astype(jnp.bfloat16), tp["fc1_w"].T.astype(jnp.bfloat16),
                preferred_element_type=jnp.float32)
    h = jnp.maximum(h + tp["fc1_b"], 0.0)
    return jnp.dot(h, tp["fc2_w"].T, preferred_element_type=jnp.float32) + tp["fc2_b"]


if __name__ == "__main__":
    # Small demo shapes; the real module uses input_length=7500 (same construction --
    # floor pooling handles 7500 -> 3750 -> 1875 -> 937 and K padding handles 128*937).
    B, Cin, L, num_classes = 2, 4, 64, 5
    L3 = ((L // 2) // 2) // 2
    flatten_size = 128 * L3                            # analog of _get_flatten_size

    key = jax.random.PRNGKey(0)
    ks = jax.random.split(key, 11)

    def init(k, shape, scale=0.05):
        return (scale * jax.random.normal(k, shape)).astype(jnp.float32)

    torch_params = {                                   # PyTorch-native layouts
        "conv1_w": init(ks[0], (32, Cin, 3)),  "conv1_b": init(ks[1], (32,)),
        "conv2_w": init(ks[2], (64, 32, 3)),   "conv2_b": init(ks[3], (64,)),
        "conv3_w": init(ks[4], (128, 64, 3)),  "conv3_b": init(ks[5], (128,)),
        "fc1_w":   init(ks[6], (128, flatten_size)), "fc1_b": init(ks[7], (128,)),
        "fc2_w":   init(ks[8], (num_classes, 128)),  "fc2_b": init(ks[9], (num_classes,)),
    }
    # block_k=384 at demo size exercises both multi-step K accumulation (3 steps/half) and
    # the zero-padded ragged K edge (1024 -> 1152); at input_length=7500 the default 8192
    # gives ~1 MiB bf16 weight tiles per hidden half.
    params = prepare_params(torch_params, block_k=384)

    x = jax.random.normal(ks[10], (B, Cin, L), dtype=jnp.float32)   # NCW like PyTorch

    out = jax.block_until_ready(simple_cnn1d_forward(x, params))
    ref = jax.block_until_ready(reference_forward(x, torch_params))

    assert out.shape == (B, num_classes), out.shape
    assert jnp.allclose(out, ref, atol=5e-3, rtol=5e-2), float(jnp.max(jnp.abs(out - ref)))

    print("KERNEL_OK")
</pallas_src>

<mosaic_0001>
module attributes {stable_mosaic.version = 11 : i64} {
  func.func @fused_conv_kernel(%arg0: i32, %arg1: memref<1x64x4xf32, #tpu.memory_space<vmem>>, %arg2: memref<3x4x32xf32, #tpu.memory_space<vmem>>, %arg3: memref<1x32xf32, #tpu.memory_space<vmem>>, %arg4: memref<3x32x64xf32, #tpu.memory_space<vmem>>, %arg5: memref<1x64xf32, #tpu.memory_space<vmem>>, %arg6: memref<3x64x128xf32, #tpu.memory_space<vmem>>, %arg7: memref<1x128xf32, #tpu.memory_space<vmem>>, %arg8: memref<1x8x128xbf16, #tpu.memory_space<vmem>>) attributes {dimension_semantics = [#tpu.dimension_semantics<parallel>], iteration_bounds = array<i64: 2>, scalar_prefetch = 0 : i64, scratch_operands = 0 : i64, tpu.core_type = #tpu.core_type<tc>, window_params = [{transform_indices = @transform_0, window_bounds = array<i64: 1, 64, 4>}, {pipeline_mode = #tpu.pipeline_mode<synchronous>, transform_indices = @transform_1, window_bounds = array<i64: 3, 4, 32>}, {pipeline_mode = #tpu.pipeline_mode<synchronous>, transform_indices = @transform_2, window_bounds = array<i64: 1, 32>}, {pipeline_mode = #tpu.pipeline_mode<synchronous>, transform_indices = @transform_3, window_bounds = array<i64: 3, 32, 64>}, {pipeline_mode = #tpu.pipeline_mode<synchronous>, transform_indices = @transform_4, window_bounds = array<i64: 1, 64>}, {pipeline_mode = #tpu.pipeline_mode<synchronous>, transform_indices = @transform_5, window_bounds = array<i64: 3, 64, 128>}, {pipeline_mode = #tpu.pipeline_mode<synchronous>, transform_indices = @transform_6, window_bounds = array<i64: 1, 128>}, {transform_indices = @transform_7, window_bounds = array<i64: 1, 8, 128>}]} {
    %c0 = arith.constant 0 : index
    %c0_0 = arith.constant 0 : index
    %c0_1 = arith.constant 0 : index
    %0 = vector.load %arg1[%c0, %c0_0, %c0_1] : memref<1x64x4xf32, #tpu.memory_space<vmem>>, vector<1x64x4xf32>
    %1 = vector.shape_cast %0 : vector<1x64x4xf32> to vector<64x4xf32>
    %cst = arith.constant 0.000000e+00 : f32
    %2 = vector.broadcast %cst : f32 to vector<1x4xf32>
    %3 = vector.extract_strided_slice %1 {offsets = [0, 0], sizes = [63, 4], strides = [1, 1]} : vector<64x4xf32> to vector<63x4xf32>
    %4 = tpu.concatenate %2, %3 in 0 : vector<1x4xf32>, vector<63x4xf32> -> vector<64x4xf32>
    %5 = vector.extract_strided_slice %1 {offsets = [1, 0], sizes = [63, 4], strides = [1, 1]} : vector<64x4xf32> to vector<63x4xf32>
    %6 = tpu.concatenate %5, %2 in 0 : vector<63x4xf32>, vector<1x4xf32> -> vector<64x4xf32>
    %c0_2 = arith.constant 0 : index
    %c0_3 = arith.constant 0 : index
    %c0_4 = arith.constant 0 : index
    %7 = vector.load %arg2[%c0_2, %c0_3, %c0_4] : memref<3x4x32xf32, #tpu.memory_space<vmem>>, vector<1x4x32xf32>
    %8 = vector.shape_cast %7 : vector<1x4x32xf32> to vector<4x32xf32>
    %cst_5 = arith.constant dense<0.000000e+00> : vector<64x32xf32>
    %9 = tpu.matmul %4, %8, %cst_5 {dimension_numbers = #tpu.dot_dimension_numbers<[1], [0], [0], [1], [0, 0, 1, 1], [], []>} : vector<64x4xf32>, vector<4x32xf32>, vector<64x32xf32> -> vector<64x32xf32>
    %c1 = arith.constant 1 : index
    %c0_6 = arith.constant 0 : index
    %c0_7 = arith.constant 0 : index
    %10 = vector.load %arg2[%c1, %c0_6, %c0_7] : memref<3x4x32xf32, #tpu.memory_space<vmem>>, vector<1x4x32xf32>
    %11 = vector.shape_cast %10 : vector<1x4x32xf32> to vector<4x32xf32>
    %cst_8 = arith.constant dense<0.000000e+00> : vector<64x32xf32>
    %12 = tpu.matmul %1, %11, %cst_8 {dimension_numbers = #tpu.dot_dimension_numbers<[1], [0], [0], [1], [0, 0, 1, 1], [], []>} : vector<64x4xf32>, vector<4x32xf32>, vector<64x32xf32> -> vector<64x32xf32>
    %13 = arith.addf %9, %12 : vector<64x32xf32>
    %c2 = arith.constant 2 : index
    %c0_9 = arith.constant 0 : index
    %c0_10 = arith.constant 0 : index
    %14 = vector.load %arg2[%c2, %c0_9, %c0_10] : memref<3x4x32xf32, #tpu.memory_space<vmem>>, vector<1x4x32xf32>
    %15 = vector.shape_cast %14 : vector<1x4x32xf32> to vector<4x32xf32>
    %cst_11 = arith.constant dense<0.000000e+00> : vector<64x32xf32>
    %16 = tpu.matmul %6, %15, %cst_11 {dimension_numbers = #tpu.dot_dimension_numbers<[1], [0], [0], [1], [0, 0, 1, 1], [], []>} : vector<64x4xf32>, vector<4x32xf32>, vector<64x32xf32> -> vector<64x32xf32>
    %17 = arith.addf %13, %16 : vector<64x32xf32>
    %c0_12 = arith.constant 0 : index
    %c0_13 = arith.constant 0 : index
    %18 = vector.load %arg3[%c0_12, %c0_13] : memref<1x32xf32, #tpu.memory_space<vmem>>, vector<1x32xf32>
    %19 = vector.broadcast %18 : vector<1x32xf32> to vector<64x32xf32>
    %20 = arith.addf %17, %19 : vector<64x32xf32>
    %cst_14 = arith.constant 0.000000e+00 : f32
    %21 = vector.broadcast %cst_14 : f32 to vector<64x32xf32>
    %22 = arith.maximumf %20, %21 : vector<64x32xf32>
    %23 = vector.shape_cast %22 : vector<64x32xf32> to vector<32x2x32xf32>
    %cst_15 = arith.constant dense<0xFF800000> : vector<32x32xf32>
    %24 = vector.multi_reduction <maximumf>, %23, %cst_15 [1] : vector<32x2x32xf32> to vector<32x32xf32>
    %cst_16 = arith.constant 0.000000e+00 : f32
    %25 = vector.broadcast %cst_16 : f32 to vector<1x32xf32>
    %26 = vector.extract_strided_slice %24 {offsets = [0, 0], sizes = [31, 32], strides = [1, 1]} : vector<32x32xf32> to vector<31x32xf32>
    %27 = tpu.concatenate %25, %26 in 0 : vector<1x32xf32>, vector<31x32xf32> -> vector<32x32xf32>
    %28 = vector.extract_strided_slice %24 {offsets = [1, 0], sizes = [31, 32], strides = [1, 1]} : vector<32x32xf32> to vector<31x32xf32>
    %29 = tpu.concatenate %28, %25 in 0 : vector<31x32xf32>, vector<1x32xf32> -> vector<32x32xf32>
    %c0_17 = arith.constant 0 : index
    %c0_18 = arith.constant 0 : index
    %c0_19 = arith.constant 0 : index
    %30 = vector.load %arg4[%c0_17, %c0_18, %c0_19] : memref<3x32x64xf32, #tpu.memory_space<vmem>>, vector<1x32x64xf32>
    %31 = vector.shape_cast %30 : vector<1x32x64xf32> to vector<32x64xf32>
    %cst_20 = arith.constant dense<0.000000e+00> : vector<32x64xf32>
    %32 = tpu.matmul %27, %31, %cst_20 {dimension_numbers = #tpu.dot_dimension_numbers<[1], [0], [0], [1], [0, 0, 1, 1], [], []>} : vector<32x32xf32>, vector<32x64xf32>, vector<32x64xf32> -> vector<32x64xf32>
    %c1_21 = arith.constant 1 : index
    %c0_22 = arith.constant 0 : index
    %c0_23 = arith.constant 0 : index
    %33 = vector.load %arg4[%c1_21, %c0_22, %c0_23] : memref<3x32x64xf32, #tpu.memory_space<vmem>>, vector<1x32x64xf32>
    %34 = vector.shape_cast %33 : vector<1x32x64xf32> to vector<32x64xf32>
    %cst_24 = arith.constant dense<0.000000e+00> : vector<32x64xf32>
    %35 = tpu.matmul %24, %34, %cst_24 {dimension_numbers = #tpu.dot_dimension_numbers<[1], [0], [0], [1], [0, 0, 1, 1], [], []>} : vector<32x32xf32>, vector<32x64xf32>, vector<32x64xf32> -> vector<32x64xf32>
    %36 = arith.addf %32, %35 : vector<32x64xf32>
    %c2_25 = arith.constant 2 : index
    %c0_26 = arith.constant 0 : index
    %c0_27 = arith.constant 0 : index
    %37 = vector.load %arg4[%c2_25, %c0_26, %c0_27] : memref<3x32x64xf32, #tpu.memory_space<vmem>>, vector<1x32x64xf32>
    %38 = vector.shape_cast %37 : vector<1x32x64xf32> to vector<32x64xf32>
    %cst_28 = arith.constant dense<0.000000e+00> : vector<32x64xf32>
    %39 = tpu.matmul %29, %38, %cst_28 {dimension_numbers = #tpu.dot_dimension_numbers<[1], [0], [0], [1], [0, 0, 1, 1], [], []>} : vector<32x32xf32>, vector<32x64xf32>, vector<32x64xf32> -> vector<32x64xf32>
    %40 = arith.addf %36, %39 : vector<32x64xf32>
    %c0_29 = arith.constant 0 : index
    %c0_30 = arith.constant 0 : index
    %41 = vector.load %arg5[%c0_29, %c0_30] : memref<1x64xf32, #tpu.memory_space<vmem>>, vector<1x64xf32>
    %42 = vector.broadcast %41 : vector<1x64xf32> to vector<32x64xf32>
    %43 = arith.addf %40, %42 : vector<32x64xf32>
    %cst_31 = arith.constant 0.000000e+00 : f32
    %44 = vector.broadcast %cst_31 : f32 to vector<32x64xf32>
    %45 = arith.maximumf %43, %44 : vector<32x64xf32>
    %46 = vector.shape_cast %45 : vector<32x64xf32> to vector<16x2x64xf32>
    %cst_32 = arith.constant dense<0xFF800000> : vector<16x64xf32>
    %47 = vector.multi_reduction <maximumf>, %46, %cst_32 [1] : vector<16x2x64xf32> to vector<16x64xf32>
    %cst_33 = arith.constant 0.000000e+00 : f32
    %48 = vector.broadcast %cst_33 : f32 to vector<1x64xf32>
    %49 = vector.extract_strided_slice %47 {offsets = [0, 0], sizes = [15, 64], strides = [1, 1]} : vector<16x64xf32> to vector<15x64xf32>
    %50 = tpu.concatenate %48, %49 in 0 : vector<1x64xf32>, vector<15x64xf32> -> vector<16x64xf32>
    %51 = vector.extract_strided_slice %47 {offsets = [1, 0], sizes = [15, 64], strides = [1, 1]} : vector<16x64xf32> to vector<15x64xf32>
    %52 = tpu.concatenate %51, %48 in 0 : vector<15x64xf32>, vector<1x64xf32> -> vector<16x64xf32>
    %c0_34 = arith.constant 0 : index
    %c0_35 = arith.constant 0 : index
    %c0_36 = arith.constant 0 : index
    %53 = vector.load %arg6[%c0_34, %c0_35, %c0_36] : memref<3x64x128xf32, #tpu.memory_space<vmem>>, vector<1x64x128xf32>
    %54 = vector.shape_cast %53 : vector<1x64x128xf32> to vector<64x128xf32>
    %cst_37 = arith.constant dense<0.000000e+00> : vector<16x128xf32>
    %55 = tpu.matmul %50, %54, %cst_37 {dimension_numbers = #tpu.dot_dimension_numbers<[1], [0], [0], [1], [0, 0, 1, 1], [], []>} : vector<16x64xf32>, vector<64x128xf32>, vector<16x128xf32> -> vector<16x128xf32>
    %c1_38 = arith.constant 1 : index
    %c0_39 = arith.constant 0 : index
    %c0_40 = arith.constant 0 : index
    %56 = vector.load %arg6[%c1_38, %c0_39, %c0_40] : memref<3x64x128xf32, #tpu.memory_space<vmem>>, vector<1x64x128xf32>
    %57 = vector.shape_cast %56 : vector<1x64x128xf32> to vector<64x128xf32>
    %cst_41 = arith.constant dense<0.000000e+00> : vector<16x128xf32>
    %58 = tpu.matmul %47, %57, %cst_41 {dimension_numbers = #tpu.dot_dimension_numbers<[1], [0], [0], [1], [0, 0, 1, 1], [], []>} : vector<16x64xf32>, vector<64x128xf32>, vector<16x128xf32> -> vector<16x128xf32>
    %59 = arith.addf %55, %58 : vector<16x128xf32>
    %c2_42 = arith.constant 2 : index
    %c0_43 = arith.constant 0 : index
    %c0_44 = arith.constant 0 : index
    %60 = vector.load %arg6[%c2_42, %c0_43, %c0_44] : memref<3x64x128xf32, #tpu.memory_space<vmem>>, vector<1x64x128xf32>
    %61 = vector.shape_cast %60 : vector<1x64x128xf32> to vector<64x128xf32>
    %cst_45 = arith.constant dense<0.000000e+00> : vector<16x128xf32>
    %62 = tpu.matmul %52, %61, %cst_45 {dimension_numbers = #tpu.dot_dimension_numbers<[1], [0], [0], [1], [0, 0, 1, 1], [], []>} : vector<16x64xf32>, vector<64x128xf32>, vector<16x128xf32> -> vector<16x128xf32>
    %63 = arith.addf %59, %62 : vector<16x128xf32>
    %c0_46 = arith.constant 0 : index
    %c0_47 = arith.constant 0 : index
    %64 = vector.load %arg7[%c0_46, %c0_47] : memref<1x128xf32, #tpu.memory_space<vmem>>, vector<1x128xf32>
    %65 = vector.broadcast %64 : vector<1x128xf32> to vector<16x128xf32>
    %66 = arith.addf %63, %65 : vector<16x128xf32>
    %cst_48 = arith.constant 0.000000e+00 : f32
    %67 = vector.broadcast %cst_48 : f32 to vector<16x128xf32>
    %68 = arith.maximumf %66, %67 : vector<16x128xf32>
    %69 = vector.shape_cast %68 : vector<16x128xf32> to vector<8x2x128xf32>
    %cst_49 = arith.constant dense<0xFF800000> : vector<8x128xf32>
    %70 = vector.multi_reduction <maximumf>, %69, %cst_49 [1] : vector<8x2x128xf32> to vector<8x128xf32>
    %71 = arith.truncf %70 : vector<8x128xf32> to vector<8x128xbf16>
    %c0_50 = arith.constant 0 : index
    %c0_51 = arith.constant 0 : index
    %c0_52 = arith.constant 0 : index
    %72 = vector.load %arg8[%c0_50, %c0_51, %c0_52] : memref<1x8x128xbf16, #tpu.memory_space<vmem>>, vector<1x8x128xbf16>
    %73 = vector.shape_cast %72 : vector<1x8x128xbf16> to vector<8x128xbf16>
    %74 = vector.shape_cast %71 : vector<8x128xbf16> to vector<1x8x128xbf16>
    tpu.vector_store %arg8[%c0_50, %c0_51, %c0_52], %74 {strides = array<i32>} : memref<1x8x128xbf16, #tpu.memory_space<vmem>>, vector<1x8x128xbf16>,
    return
  }
  func.func @transform_0(%arg0: i32) -> (i32, i32, i32) {
    %c0_i32 = arith.constant 0 : i32
    %c0_i32_0 = arith.constant 0 : i32
    %c0_i32_1 = arith.constant 0 : i32
    return %arg0, %c0_i32, %c0_i32_0 : i32, i32, i32
  }
  func.func @transform_1(%arg0: i32) -> (i32, i32, i32) {
    %c0_i32 = arith.constant 0 : i32
    %c0_i32_0 = arith.constant 0 : i32
    %c0_i32_1 = arith.constant 0 : i32
    %c0_i32_2 = arith.constant 0 : i32
    return %c0_i32, %c0_i32_0, %c0_i32_1 : i32, i32, i32
  }
  func.func @transform_2(%arg0: i32) -> (i32, i32) {
    %c0_i32 = arith.constant 0 : i32
    %c0_i32_0 = arith.constant 0 : i32
    %c0_i32_1 = arith.constant 0 : i32
    return %c0_i32, %c0_i32_0 : i32, i32
  }
  func.func @transform_3(%arg0: i32) -> (i32, i32, i32) {
    %c0_i32 = arith.constant 0 : i32
    %c0_i32_0 = arith.constant 0 : i32
    %c0_i32_1 = arith.constant 0 : i32
    %c0_i32_2 = arith.constant 0 : i32
    return %c0_i32, %c0_i32_0, %c0_i32_1 : i32, i32, i32
  }
  func.func @transform_4(%arg0: i32) -> (i32, i32) {
    %c0_i32 = arith.constant 0 : i32
    %c0_i32_0 = arith.constant 0 : i32
    %c0_i32_1 = arith.constant 0 : i32
    return %c0_i32, %c0_i32_0 : i32, i32
  }
  func.func @transform_5(%arg0: i32) -> (i32, i32, i32) {
    %c0_i32 = arith.constant 0 : i32
    %c0_i32_0 = arith.constant 0 : i32
    %c0_i32_1 = arith.constant 0 : i32
    %c0_i32_2 = arith.constant 0 : i32
    return %c0_i32, %c0_i32_0, %c0_i32_1 : i32, i32, i32
  }
  func.func @transform_6(%arg0: i32) -> (i32, i32) {
    %c0_i32 = arith.constant 0 : i32
    %c0_i32_0 = arith.constant 0 : i32
    %c0_i32_1 = arith.constant 0 : i32
    return %c0_i32, %c0_i32_0 : i32, i32
  }
  func.func @transform_7(%arg0: i32) -> (i32, i32, i32) {
    %c0_i32 = arith.constant 0 : i32
    %c0_i32_0 = arith.constant 0 : i32
    %c0_i32_1 = arith.constant 0 : i32
    return %arg0, %c0_i32, %c0_i32_0 : i32, i32, i32
  }
}

</mosaic_0001>

<llo_original>
// kernel: tpu_custom_call.1
$region0: #{tpu_custom_call.1}
  #allocation0 [shape = 'u32[]', space=smem, size = 0x4, offset = 0x4, fixed_abs, tag = 'smem constant byte address 0x4 - core index']
  #allocation1 [shape = 'u32[144,128]{1,0:T(1,128)}', space=vmem, size = 0x12000, scoped, tag = 'internal scratch']
  %s0 = inlined_call_operand.vmem [shape: f32[2,64,4], index: 0, kind: input, shape index: {}]
  %s1 = inlined_call_operand.vmem [shape: f32[3,4,32], index: 1, kind: input, shape index: {}]
  %s2 = inlined_call_operand.vmem [shape: f32[1,32], index: 2, kind: input, shape index: {}]
  %s3 = inlined_call_operand.vmem [shape: f32[3,32,64], index: 3, kind: input, shape index: {}]
  %s4 = inlined_call_operand.vmem [shape: f32[1,64], index: 4, kind: input, shape index: {}]
  %s5 = inlined_call_operand.hbm [shape: f32[3,64,128], index: 5, kind: input, shape index: {}]
  %s6 = inlined_call_operand.vmem [shape: f32[1,128], index: 6, kind: input, shape index: {}]
  %s7 = inlined_call_operand.hbm [shape: bf16[2,8,128], index: 7, kind: output, shape index: {}]
  %s8 = sld [smem:[#allocation0]]
  $region65: #{tpu_custom_call.1} parent=0
    _
  %s10 = ssub.s32 1, %s8
  %s11 = scalar_select 0, %s10, %s8
  $region1: #{tpu_custom_call.1} parent=0
    #allocation2 [shape = 'u8[98304]{0}', space=vmem, size = 0x18000, scoped, tag = 'input window, operand 5, single buffered']
    #allocation3 [shape = 's32[2]{0}', space=sflag, size = 0x8, scoped, tag = 'scoped memory for tpu_custom_call.1']
    #allocation4 [shape = 's32[2]{0}', space=sflag, size = 0x8, scoped, tag = 'scoped memory for tpu_custom_call.1']
    #allocation5 [shape = 'u8[4096]{0}', space=vmem, size = 0x1000, scoped, tag = 'output window, operand 0']
    %12 = vsyncpa [#allocation3], 0
    %13 = vsyncpa [#allocation4], 0
    %s14 = scalar_lea.sflag [#allocation4], 1
    %15 = vsyncpa %s14, 0
    loop: start=0, step=1, limit=4
    $region2: #{tpu_custom_call.1} parent=1 // loop_pre_header
      _
    $region3: #{tpu_custom_call.1} parent=1 // loop_header
      %s17 = sphi 0, %s21
      %p18 = scmp.ge.s32.totalorder %s17, 4
      %s27 = sphi 0, %s29
      %s30 = sphi 0, %s27
      %s31 = sphi 0, %s30
      %s47 = sphi 0, %s31
      %s51 = sphi 0, %s51
      %s53 = sphi 0, %s51
      %s54 = sphi 0, %s53
      %s68 = sphi 0, %s54
      %s72 = sphi 0, %s72
      %s74 = sphi 0, %s72
      %s75 = sphi 0, %s74
      %s89 = sphi 0, %s75
      %s93 = sphi 0, %s93
      %s95 = sphi 0, %s93
      %s96 = sphi 0, %s95
      %s110 = sphi 0, %s96
      %s114 = sphi 0, %s114
      %s116 = sphi 0, %s114
      %s117 = sphi 0, %s116
      %s131 = sphi 0, %s117
      %s135 = sphi 0, %s135
      %s137 = sphi 0, %s135
      %s138 = sphi 0, %s137
      %s152 = sphi 0, %s138
      %s156 = sphi 0, %s156
      %s158 = sphi 0, %s156
      %s159 = sphi 0, %s158
      %s173 = sphi 0, %s159
      %s179 = sphi 0, %s181
      %s182 = sphi 0, %s179
      %s183 = sphi 0, %s182
      %s199 = sphi 0, %s183
    $region4: #{tpu_custom_call.1} parent=1 // loop_header_branch
      %20 = sbr.rel (%p18) target = $region8
    $region5: #{tpu_custom_call.1} parent=1 // loop_body
      %s22 = ssub.s32 %s17, 1
      %s23 = ssub.s32 %s17, 2
      %s24 = sadd.s32 %s17, 1
      %s25 = ssub.s32 %s17, %s24
      %p26 = scmp.eq.s32.totalorder %s25, 0
      %s28 = sadd.s32 %s27, 1
      %s29 = scalar_select %p26, %s27, %s28
      %p32 = pneg %p26
      %p33 = scmp.eq.s32.totalorder %s17, 1
      %p34 = por %p32, %p33
      %p35 = scmp.ne.s32.totalorder %s27, %s30
      %p36 = scmp.eq.s32.totalorder %s17, 0
      %p37 = por %p35, %p36
      %p38 = scmp.ne.s32.totalorder %s27, %s30
      %p39 = scmp.eq.s32.totalorder %s22, 1
      %p40 = por %p38, %p39
      %p41 = scmp.ne.s32.totalorder %s30, %s31
      %p42 = scmp.eq.s32.totalorder %s22, 0
      %p43 = por %p41, %p42
      %p44 = scmp.ne.s32.totalorder %s30, %s31
      %p45 = scmp.eq.s32.totalorder %s23, 1
      %p46 = por %p44, %p45
      %p48 = scmp.ne.s32.totalorder %s31, %s47
      %p49 = scmp.eq.s32.totalorder %s23, 0
      %p50 = por %p48, %p49
      %s52 = sadd.s32 %s51, 1
      %p55 = scmp.eq.s32.totalorder %s17, 1
      %p56 = scmp.ne.s32.totalorder %s51, %s53
      %p57 = scmp.eq.s32.totalorder %s17, 0
      %p58 = por %p56, %p57
      %p59 = scmp.ne.s32.totalorder %s51, %s53
      %p60 = scmp.eq.s32.totalorder %s22, 1
      %p61 = por %p59, %p60
      %p62 = scmp.ne.s32.totalorder %s53, %s54
      %p63 = scmp.eq.s32.totalorder %s22, 0
      %p64 = por %p62, %p63
      %p65 = scmp.ne.s32.totalorder %s53, %s54
      %p66 = scmp.eq.s32.totalorder %s23, 1
      %p67 = por %p65, %p66
      %p69 = scmp.ne.s32.totalorder %s54, %s68
      %p70 = scmp.eq.s32.totalorder %s23, 0
      %p71 = por %p69, %p70
      %s73 = sadd.s32 %s72, 1
      %p76 = scmp.eq.s32.totalorder %s17, 1
      %p77 = scmp.ne.s32.totalorder %s72, %s74
      %p78 = scmp.eq.s32.totalorder %s17, 0
      %p79 = por %p77, %p78
      %p80 = scmp.ne.s32.totalorder %s72, %s74
      %p81 = scmp.eq.s32.totalorder %s22, 1
      %p82 = por %p80, %p81
      %p83 = scmp.ne.s32.totalorder %s74, %s75
      %p84 = scmp.eq.s32.totalorder %s22, 0
      %p85 = por %p83, %p84
      %p86 = scmp.ne.s32.totalorder %s74, %s75
      %p87 = scmp.eq.s32.totalorder %s23, 1
      %p88 = por %p86, %p87
      %p90 = scmp.ne.s32.totalorder %s75, %s89
      %p91 = scmp.eq.s32.totalorder %s23, 0
      %p92 = por %p90, %p91
      %s94 = sadd.s32 %s93, 1
      %p97 = scmp.eq.s32.totalorder %s17, 1
      %p98 = scmp.ne.s32.totalorder %s93, %s95
      %p99 = scmp.eq.s32.totalorder %s17, 0
      %p100 = por %p98, %p99
      %p101 = scmp.ne.s32.totalorder %s93, %s95
      %p102 = scmp.eq.s32.totalorder %s22, 1
      %p103 = por %p101, %p102
      %p104 = scmp.ne.s32.totalorder %s95, %s96
      %p105 = scmp.eq.s32.totalorder %s22, 0
      %p106 = por %p104, %p105
      %p107 = scmp.ne.s32.totalorder %s95, %s96
      %p108 = scmp.eq.s32.totalorder %s23, 1
      %p109 = por %p107, %p108
      %p111 = scmp.ne.s32.totalorder %s96, %s110
      %p112 = scmp.eq.s32.totalorder %s23, 0
      %p113 = por %p111, %p112
      %s115 = sadd.s32 %s114, 1
      %p118 = scmp.eq.s32.totalorder %s17, 1
      %p119 = scmp.ne.s32.totalorder %s114, %s116
      %p120 = scmp.eq.s32.totalorder %s17, 0
      %p121 = por %p119, %p120
      %p122 = scmp.ne.s32.totalorder %s114, %s116
      %p123 = scmp.eq.s32.totalorder %s22, 1
      %p124 = por %p122, %p123
      %p125 = scmp.ne.s32.totalorder %s116, %s117
      %p126 = scmp.eq.s32.totalorder %s22, 0
      %p127 = por %p125, %p126
      %p128 = scmp.ne.s32.totalorder %s116, %s117
      %p129 = scmp.eq.s32.totalorder %s23, 1
      %p130 = por %p128, %p129
      %p132 = scmp.ne.s32.totalorder %s117, %s131
      %p133 = scmp.eq.s32.totalorder %s23, 0
      %p134 = por %p132, %p133
      %s136 = sadd.s32 %s135, 1
      %p139 = scmp.eq.s32.totalorder %s17, 1
      %p140 = scmp.ne.s32.totalorder %s135, %s137
      %p141 = scmp.eq.s32.totalorder %s17, 0
      %p142 = por %p140, %p141
      %p143 = scmp.ne.s32.totalorder %s135, %s137
      %p144 = scmp.eq.s32.totalorder %s22, 1
      %p145 = por %p143, %p144
      %p146 = scmp.ne.s32.totalorder %s137, %s138
      %p147 = scmp.eq.s32.totalorder %s22, 0
      %p148 = por %p146, %p147
      %p149 = scmp.ne.s32.totalorder %s137, %s138
      %p150 = scmp.eq.s32.totalorder %s23, 1
      %p151 = por %p149, %p150
      %p153 = scmp.ne.s32.totalorder %s138, %s152
      %p154 = scmp.eq.s32.totalorder %s23, 0
      %p155 = por %p153, %p154
      %s157 = sadd.s32 %s156, 1
      %p160 = scmp.eq.s32.totalorder %s17, 1
      %p161 = scmp.ne.s32.totalorder %s156, %s158
      %p162 = scmp.eq.s32.totalorder %s17, 0
      %p163 = por %p161, %p162
      %p164 = scmp.ne.s32.totalorder %s156, %s158
      %p165 = scmp.eq.s32.totalorder %s22, 1
      %p166 = por %p164, %p165
      %p167 = scmp.ne.s32.totalorder %s158, %s159
      %p168 = scmp.eq.s32.totalorder %s22, 0
      %p169 = por %p167, %p168
      %p170 = scmp.ne.s32.totalorder %s158, %s159
      %p171 = scmp.eq.s32.totalorder %s23, 1
      %p172 = por %p170, %p171
      %p174 = scmp.ne.s32.totalorder %s159, %s173
      %p175 = scmp.eq.s32.totalorder %s23, 0
      %p176 = por %p174, %p175
      %s177 = ssub.s32 %s17, %s24
      %p178 = scmp.eq.s32.totalorder %s177, 0
      %s180 = sadd.s32 %s179, 1
      %s181 = scalar_select %p178, %s179, %s180
      %p184 = pneg %p178
      %p185 = scmp.eq.s32.totalorder %s17, 1
      %p186 = por %p184, %p185
      %p187 = scmp.ne.s32.totalorder %s179, %s182
      %p188 = scmp.eq.s32.totalorder %s17, 0
      %p189 = por %p187, %p188
      %p190 = scmp.ne.s32.totalorder %s179, %s182
      %p191 = scmp.eq.s32.totalorder %s22, 1
      %p192 = por %p190, %p191
      %p193 = scmp.ne.s32.totalorder %s182, %s183
      %p194 = scmp.eq.s32.totalorder %s22, 0
      %p195 = por %p193, %p194
      %p196 = scmp.ne.s32.totalorder %s182, %s183
      %p197 = scmp.eq.s32.totalorder %s23, 1
      %p198 = por %p196, %p197
      %p200 = scmp.ne.s32.totalorder %s183, %s199
      %p201 = scmp.eq.s32.totalorder %s23, 0
      %p202 = por %p200, %p201
      %p203 = scmp.le.s32.totalorder 1, %s17
      %p204 = scmp.lt.s32.totalorder %s17, 3
      %p205 = pnand %p203, %p204
      %p206 = pneg %p205
      // Predicated region
      $region9: #{tpu_custom_call.1} parent=5 // pred_check
        _
      $region10: #{tpu_custom_call.1} parent=5 // pred_check_branch
        %208 = sbr.rel (%p205) target = $region12
      $region11: #{tpu_custom_call.1} parent=5 // pred_region
        %s209 = ssub.s32 %s17, 1
        // Predicated region
        $region13: #{tpu_custom_call.1} parent=11 // pred_check
          %p210 = pneg %p64
        $region14: #{tpu_custom_call.1} parent=11 // pred_check_branch
          %212 = sbr.rel (%p210) target = $region16
        $region15: #{tpu_custom_call.1} parent=11 // pred_region
          _
        $region16: #{tpu_custom_call.1} parent=11 // pred_fallthru
          _
        // Predicated region
        $region17: #{tpu_custom_call.1} parent=11 // pred_check
          %p213 = pneg %p85
        $region18: #{tpu_custom_call.1} parent=11 // pred_check_branch
          %215 = sbr.rel (%p213) target = $region20
        $region19: #{tpu_custom_call.1} parent=11 // pred_region
          _
        $region20: #{tpu_custom_call.1} parent=11 // pred_fallthru
          _
        // Predicated region
        $region21: #{tpu_custom_call.1} parent=11 // pred_check
          %p216 = pneg %p106
        $region22: #{tpu_custom_call.1} parent=11 // pred_check_branch
          %218 = sbr.rel (%p216) target = $region24
        $region23: #{tpu_custom_call.1} parent=11 // pred_region
          _
        $region24: #{tpu_custom_call.1} parent=11 // pred_fallthru
          _
        // Predicated region
        $region25: #{tpu_custom_call.1} parent=11 // pred_check
          %p219 = pneg %p127
        $region26: #{tpu_custom_call.1} parent=11 // pred_check_branch
          %221 = sbr.rel (%p219) target = $region28
        $region27: #{tpu_custom_call.1} parent=11 // pred_region
          _
        $region28: #{tpu_custom_call.1} parent=11 // pred_fallthru
          _
        // Predicated region
        $region29: #{tpu_custom_call.1} parent=11 // pred_check
          %p222 = pneg %p148
        $region30: #{tpu_custom_call.1} parent=11 // pred_check_branch
          %224 = sbr.rel (%p222) target = $region32
        $region31: #{tpu_custom_call.1} parent=11 // pred_region
          %s226 = ssub.s32 3072, 3072
          %227 = vsyncadd [#allocation3], %s226
          %s228 = sshll.u32 [#allocation2], 4
          %s229 = int_to_ptr.vmem [resolvable:$true] %s228
          %234 = dma.hbm_to_vmem [thread:$0]  %s5, 3072, %s229, [#allocation3], 128, 128, 8
        $region32: #{tpu_custom_call.1} parent=11 // pred_fallthru
          _
        // Predicated region
        $region33: #{tpu_custom_call.1} parent=11 // pred_check
          %p235 = pneg %p169
        $region34: #{tpu_custom_call.1} parent=11 // pred_check_branch
          %237 = sbr.rel (%p235) target = $region36
        $region35: #{tpu_custom_call.1} parent=11 // pred_region
          _
        $region36: #{tpu_custom_call.1} parent=11 // pred_fallthru
          _
      $region12: #{tpu_custom_call.1} parent=5 // pred_fallthru
        _
      %p238 = scmp.lt.s32.totalorder %s17, 2
      // Predicated region
      $region37: #{tpu_custom_call.1} parent=5 // pred_check
        %p239 = pneg %p238
      $region38: #{tpu_custom_call.1} parent=5 // pred_check_branch
        %241 = sbr.rel (%p239) target = $region40
      $region39: #{tpu_custom_call.1} parent=5 // pred_region
        // Predicated region
        $region41: #{tpu_custom_call.1} parent=39 // pred_check
          %p242 = pneg %p37
        $region42: #{tpu_custom_call.1} parent=39 // pred_check_branch
          %244 = sbr.rel (%p242) target = $region44
        $region43: #{tpu_custom_call.1} parent=39 // pred_region
          %p245 = scmp.lt.s32.totalorder %s17, 1
          %s246 = scalar_select %p245, %s17, 1
          %s247 = smul.addr %s246, 8
          %s248 = smul.addr %s247, 8
          %s249 = scalar_lea.vmem %s0, %s248
        $region44: #{tpu_custom_call.1} parent=39 // pred_fallthru
          _
      $region40: #{tpu_custom_call.1} parent=5 // pred_fallthru
        _
      %p250 = scmp.le.s32.totalorder 1, %s17
      %p251 = scmp.lt.s32.totalorder %s17, 3
      %p252 = pnand %p250, %p251
      %p253 = pneg %p252
      // Predicated region
      $region45: #{tpu_custom_call.1} parent=5 // pred_check
        _
      $region46: #{tpu_custom_call.1} parent=5 // pred_check_branch
        %255 = sbr.rel (%p252) target = $region48
      $region47: #{tpu_custom_call.1} parent=5 // pred_region
        %s256 = ssub.s32 %s17, 1
        // Predicated region
        $region49: #{tpu_custom_call.1} parent=47 // pred_check
          %p257 = pneg %p148
        $region50: #{tpu_custom_call.1} parent=47 // pred_check_branch
          %259 = sbr.rel (%p257) target = $region52
        $region51: #{tpu_custom_call.1} parent=47 // pred_region
          %260 = dma.done [#allocation3], 3072
        $region52: #{tpu_custom_call.1} parent=47 // pred_fallthru
          _
        %p261 = scmp.lt.s32.totalorder %s22, 1
        %s262 = scalar_select %p261, %s22, 1
        %s263 = smul.addr %s262, 8
        %s264 = smul.addr %s263, 8
        %s265 = scalar_lea.vmem %s0, %s264
        %p266 = pneg %p43
        %p267 = pneg %p40
        %p268 = pneg %p64
        %p269 = pneg %p61
        %p270 = pneg %p85
        %p271 = pneg %p82
        %p272 = pneg %p106
        %p273 = pneg %p103
        %p274 = pneg %p127
        %p275 = pneg %p124
        %p276 = pneg %p148
        %p277 = pneg %p145
        %p278 = pneg %p169
        %p279 = pneg %p166
        %p280 = pneg %p195
        %p281 = pneg %p192
        %s282 = sand.u32 %s182, 1
        %s283 = scalar_lea.sflag [#allocation4], %s282
        %s284 = sand.u32 %s182, 1
        %s285 = smul.addr %s284, 4
        %s286 = scalar_lea.vmem [#allocation5], %s285
        %p287 = scmp.lt.s32.totalorder %s22, 1
        %s288 = scalar_select %p287, %s22, 1
        %s289 = smul.addr %s288, 8
        %s290 = smul.addr %s289, 8
        %s291 = scalar_lea.vmem %s0, %s290
        %v292 = vld [vmem:[%s291] sm:$0xff]
        %v293 = vld [vmem:[%s291 + $0x8] sm:$0xff]
        %v294 = vld [vmem:[%s291 + $0x10] sm:$0xff]
        %v295 = vld [vmem:[%s291 + $0x18] sm:$0xff]
        %v296 = vld [vmem:[%s291 + $0x20] sm:$0xff]
        %v297 = vld [vmem:[%s291 + $0x28] sm:$0xff]
        %v298 = vld [vmem:[%s291 + $0x30] sm:$0xff]
        %v299 = vld [vmem:[%s291 + $0x38] sm:$0xff]
        %vm308 = vcmask 1040384
        %v309 = vrot.slane %v292, 7
        %v310 = vrot.slane %v293, 7
        %v311 = vsel %vm308, %v309, %v310
        %v312 = vrot.slane %v294, 7
        %v313 = vsel %vm308, %v310, %v312
        %v314 = vrot.slane %v295, 7
        %v315 = vsel %vm308, %v312, %v314
        %v316 = vrot.slane %v296, 7
        %v317 = vsel %vm308, %v314, %v316
        %v318 = vrot.slane %v297, 7
        %v319 = vsel %vm308, %v316, %v318
        %v320 = vrot.slane %v298, 7
        %v321 = vsel %vm308, %v318, %v320
        %v322 = vrot.slane %v299, 7
        %v323 = vsel %vm308, %v320, %v322
        %v325 = vsel %vm308, 0.0, %v309
        %vm326 = vcmask 1046528
        %v327 = vrot.slane %v292, 1
        %v328 = vrot.slane %v293, 1
        %v329 = vsel %vm326, %v327, %v328
        %v330 = vrot.slane %v294, 1
        %v331 = vsel %vm326, %v328, %v330
        %v332 = vrot.slane %v295, 1
        %v333 = vsel %vm326, %v330, %v332
        %v334 = vrot.slane %v296, 1
        %v335 = vsel %vm326, %v332, %v334
        %v336 = vrot.slane %v297, 1
        %v337 = vsel %vm326, %v334, %v336
        %v338 = vrot.slane %v298, 1
        %v339 = vsel %vm326, %v336, %v338
        %v340 = vrot.slane %v299, 1
        %v341 = vsel %vm326, %v338, %v340
        %v343 = vsel %vm326, %v340, 0.0
        %v344 = vld [vmem:[%s1] sm:$0xf]
        %s345 = scalar_lea.vmem %s1, 4
        %v346 = vld [vmem:[%s345] sm:$0xf]
        %vm347 = vcmask 31744
        %v348 = vsel %vm347, %v292, 0
        %v350 = vsel %vm347, %v293, 0
        %v352 = vsel %vm347, %v294, 0
        %v354 = vsel %vm347, %v295, 0
        %v356 = vsel %vm347, %v296, 0
        %v358 = vsel %vm347, %v297, 0
        %v360 = vsel %vm347, %v298, 0
        %v362 = vsel %vm347, %v299, 0
        %vm364 = vcmask 1043456
        %v366 = vsel %vm364, %v346, 0
        %368 = vmatprep.subr.mxu0 0.0
        %369 = vmatpush1.msra.mxu0 0.0
        %370 = vmatprep.subr.mxu0 0.0
        %371 = vmatpush1.msra.mxu0 0.0
        %372 = vmatprep.subr.mxu0 0.0
        %373 = vmatpush1.msra.mxu0 0.0
        %374 = vmatprep.subr.mxu0 0.0
        %375 = vmatpush1.msra.mxu0 0.0
        %376 = vmatprep.subr.mxu0 0.0
        %377 = vmatpush1.msra.mxu0 0.0
        %378 = vmatprep.subr.mxu0 0.0
        %379 = vmatpush1.msra.mxu0 0.0
        %380 = vmatprep.subr.mxu0 0.0
        %381 = vmatpush1.msra.mxu0 0.0
        %382 = vmatprep.subr.mxu0 0.0
        %383 = vmatpush1.msra.mxu0 0.0
        %384 = vmatprep.subr.mxu0 0.0
        %385 = vmatpush1.msra.mxu0 0.0
        %386 = vmatprep.subr.mxu0 0.0
        %387 = vmatpush1.msra.mxu0 0.0
        %388 = vmatprep.subr.mxu0 0.0
        %389 = vmatpush1.msra.mxu0 0.0
        %390 = vmatprep.subr.mxu0 0.0
        %391 = vmatpush1.msra.mxu0 0.0
        %392 = vmatprep.subr.mxu0 0.0
        %393 = vmatpush1.msra.mxu0 0.0
        %394 = vmatprep.subr.mxu0 0.0
        %395 = vmatpush1.msra.mxu0 0.0
        %396 = vmatprep.subr.mxu0 0.0
        %397 = vmatpush1.msra.mxu0 0.0
        %398 = vmatprep.subr.mxu0 0.0
        %399 = vmatpush1.msra.mxu0 %v366
        %400 = vmatprep.subr.mxu0 0.0
        %401 = vmatpush2.msra.mxu0 0.0
        %402 = vmatprep.subr.mxu0 0.0
        %403 = vmatpush2.msra.mxu0 0.0
        %404 = vmatprep.subr.mxu0 0.0
        %405 = vmatpush2.msra.mxu0 0.0
        %406 = vmatprep.subr.mxu0 0.0
        %407 = vmatpush2.msra.mxu0 0.0
        %408 = vmatprep.subr.mxu0 0.0
        %409 = vmatpush2.msra.mxu0 0.0
        %410 = vmatprep.subr.mxu0 0.0
        %411 = vmatpush2.msra.mxu0 0.0
        %412 = vmatprep.subr.mxu0 0.0
        %413 = vmatpush2.msra.mxu0 0.0
        %414 = vmatprep.subr.mxu0 0.0
        %415 = vmatpush2.msra.mxu0 0.0
        %416 = vmatprep.subr.mxu0 0.0
        %417 = vmatpush2.msra.mxu0 0.0
        %418 = vmatprep.subr.mxu0 0.0
        %419 = vmatpush2.msra.mxu0 0.0
        %420 = vmatprep.subr.mxu0 0.0
        %421 = vmatpush2.msra.mxu0 0.0
        %422 = vmatprep.subr.mxu0 0.0
        %423 = vmatpush2.msra.mxu0 0.0
        %424 = vmatprep.subr.mxu0 0.0
        %425 = vmatpush2.msra.mxu0 0.0
        %426 = vmatprep.subr.mxu0 0.0
        %427 = vmatpush2.msra.mxu0 0.0
        %428 = vmatprep.subr.mxu0 0.0
        %429 = vmatpush2.msra.mxu0 0.0
        %430 = vmatprep.subr.mxu0 0.0
        %431 = vmatpush2.msra.mxu0 0.0
        %432 = vmatprep.mubr.f32.mxu0 0.0
        %433 = vmatmul.mubr.f32.gmra.mxu0 %v348
        %v434 = vpop.f32.mrf.mxu0
        %v435 = vadd.f32 0.0, %v434
        %v436 = vpop.f32.mrf.mxu0
        %437 = vmatprep.mubr.f32.mxu0 0.0
        %438 = vmatmul.mubr.f32.gmra.mxu0 %v350
        %v439 = vpop.f32.mrf.mxu0
        %v440 = vadd.f32 0.0, %v439
        %v441 = vpop.f32.mrf.mxu0
        %442 = vmatprep.mubr.f32.mxu0 0.0
        %443 = vmatmul.mubr.f32.gmra.mxu0 %v352
        %v444 = vpop.f32.mrf.mxu0
        %v445 = vadd.f32 0.0, %v444
        %v446 = vpop.f32.mrf.mxu0
        %447 = vmatprep.mubr.f32.mxu0 0.0
        %448 = vmatmul.mubr.f32.gmra.mxu0 %v354
        %v449 = vpop.f32.mrf.mxu0
        %v450 = vadd.f32 0.0, %v449
        %v451 = vpop.f32.mrf.mxu0
        %452 = vmatprep.mubr.f32.mxu0 0.0
        %453 = vmatmul.mubr.f32.gmra.mxu0 %v356
        %v454 = vpop.f32.mrf.mxu0
        %v455 = vadd.f32 0.0, %v454
        %v456 = vpop.f32.mrf.mxu0
        %457 = vmatprep.mubr.f32.mxu0 0.0
        %458 = vmatmul.mubr.f32.gmra.mxu0 %v358
        %v459 = vpop.f32.mrf.mxu0
        %v460 = vadd.f32 0.0, %v459
        %v461 = vpop.f32.mrf.mxu0
        %462 = vmatprep.mubr.f32.mxu0 0.0
        %463 = vmatmul.mubr.f32.gmra.mxu0 %v360
        %v464 = vpop.f32.mrf.mxu0
        %v465 = vadd.f32 0.0, %v464
        %v466 = vpop.f32.mrf.mxu0
        %467 = vmatprep.mubr.f32.mxu0 0.0
        %468 = vmatmul.mubr.f32.gmra.mxu0 %v362
        %v469 = vpop.f32.mrf.mxu0
        %v470 = vadd.f32 0.0, %v469
        %v471 = vpop.f32.mrf.mxu0
        %472 = vdwg.mxu0
        %v474 = vsel %vm347, %v325, 0
        %v476 = vsel %vm347, %v311, 0
        %v478 = vsel %vm347, %v313, 0
        %v480 = vsel %vm347, %v315, 0
        %v482 = vsel %vm347, %v317, 0
        %v484 = vsel %vm347, %v319, 0
        %v486 = vsel %vm347, %v321, 0
        %v488 = vsel %vm347, %v323, 0
        %v491 = vsel %vm364, %v344, 0
        %493 = vmatprep.subr.mxu0 0.0
        %494 = vmatpush1.msra.mxu0 0.0
        %495 = vmatprep.subr.mxu0 0.0
        %496 = vmatpush1.msra.mxu0 0.0
        %497 = vmatprep.subr.mxu0 0.0
        %498 = vmatpush1.msra.mxu0 0.0
        %499 = vmatprep.subr.mxu0 0.0
        %500 = vmatpush1.msra.mxu0 0.0
        %501 = vmatprep.subr.mxu0 0.0
        %502 = vmatpush1.msra.mxu0 0.0
        %503 = vmatprep.subr.mxu0 0.0
        %504 = vmatpush1.msra.mxu0 0.0
        %505 = vmatprep.subr.mxu0 0.0
        %506 = vmatpush1.msra.mxu0 0.0
        %507 = vmatprep.subr.mxu0 0.0
        %508 = vmatpush1.msra.mxu0 0.0
        %509 = vmatprep.subr.mxu0 0.0
        %510 = vmatpush1.msra.mxu0 0.0
        %511 = vmatprep.subr.mxu0 0.0
        %512 = vmatpush1.msra.mxu0 0.0
        %513 = vmatprep.subr.mxu0 0.0
        %514 = vmatpush1.msra.mxu0 0.0
        %515 = vmatprep.subr.mxu0 0.0
        %516 = vmatpush1.msra.mxu0 0.0
        %517 = vmatprep.subr.mxu0 0.0
        %518 = vmatpush1.msra.mxu0 0.0
        %519 = vmatprep.subr.mxu0 0.0
        %520 = vmatpush1.msra.mxu0 0.0
        %521 = vmatprep.subr.mxu0 0.0
        %522 = vmatpush1.msra.mxu0 0.0
        %523 = vmatprep.subr.mxu0 0.0
        %524 = vmatpush1.msra.mxu0 %v491
        %525 = vmatprep.subr.mxu0 0.0
        %526 = vmatpush2.msra.mxu0 0.0
        %527 = vmatprep.subr.mxu0 0.0
        %528 = vmatpush2.msra.mxu0 0.0
        %529 = vmatprep.subr.mxu0 0.0
        %530 = vmatpush2.msra.mxu0 0.0
        %531 = vmatprep.subr.mxu0 0.0
        %532 = vmatpush2.msra.mxu0 0.0
        %533 = vmatprep.subr.mxu0 0.0
        %534 = vmatpush2.msra.mxu0 0.0
        %535 = vmatprep.subr.mxu0 0.0
        %536 = vmatpush2.msra.mxu0 0.0
        %537 = vmatprep.subr.mxu0 0.0
        %538 = vmatpush2.msra.mxu0 0.0
        %539 = vmatprep.subr.mxu0 0.0
        %540 = vmatpush2.msra.mxu0 0.0
        %541 = vmatprep.subr.mxu0 0.0
        %542 = vmatpush2.msra.mxu0 0.0
        %543 = vmatprep.subr.mxu0 0.0
        %544 = vmatpush2.msra.mxu0 0.0
        %545 = vmatprep.subr.mxu0 0.0
        %546 = vmatpush2.msra.mxu0 0.0
        %547 = vmatprep.subr.mxu0 0.0
        %548 = vmatpush2.msra.mxu0 0.0
        %549 = vmatprep.subr.mxu0 0.0
        %550 = vmatpush2.msra.mxu0 0.0
        %551 = vmatprep.subr.mxu0 0.0
        %552 = vmatpush2.msra.mxu0 0.0
        %553 = vmatprep.subr.mxu0 0.0
        %554 = vmatpush2.msra.mxu0 0.0
        %555 = vmatprep.subr.mxu0 0.0
        %556 = vmatpush2.msra.mxu0 0.0
        %557 = vmatprep.mubr.f32.mxu0 0.0
        %558 = vmatmul.mubr.f32.gmra.mxu0 %v474
        %v559 = vpop.f32.mrf.mxu0
        %v560 = vadd.f32 %v435, %v559
        %v561 = vpop.f32.mrf.mxu0
        %562 = vmatprep.mubr.f32.mxu0 0.0
        %563 = vmatmul.mubr.f32.gmra.mxu0 %v476
        %v564 = vpop.f32.mrf.mxu0
        %v565 = vadd.f32 %v440, %v564
        %v566 = vpop.f32.mrf.mxu0
        %567 = vmatprep.mubr.f32.mxu0 0.0
        %568 = vmatmul.mubr.f32.gmra.mxu0 %v478
        %v569 = vpop.f32.mrf.mxu0
        %v570 = vadd.f32 %v445, %v569
        %v571 = vpop.f32.mrf.mxu0
        %572 = vmatprep.mubr.f32.mxu0 0.0
        %573 = vmatmul.mubr.f32.gmra.mxu0 %v480
        %v574 = vpop.f32.mrf.mxu0
        %v575 = vadd.f32 %v450, %v574
        %v576 = vpop.f32.mrf.mxu0
        %577 = vmatprep.mubr.f32.mxu0 0.0
        %578 = vmatmul.mubr.f32.gmra.mxu0 %v482
        %v579 = vpop.f32.mrf.mxu0
        %v580 = vadd.f32 %v455, %v579
        %v581 = vpop.f32.mrf.mxu0
        %582 = vmatprep.mubr.f32.mxu0 0.0
        %583 = vmatmul.mubr.f32.gmra.mxu0 %v484
        %v584 = vpop.f32.mrf.mxu0
        %v585 = vadd.f32 %v460, %v584
        %v586 = vpop.f32.mrf.mxu0
        %587 = vmatprep.mubr.f32.mxu0 0.0
        %588 = vmatmul.mubr.f32.gmra.mxu0 %v486
        %v589 = vpop.f32.mrf.mxu0
        %v590 = vadd.f32 %v465, %v589
        %v591 = vpop.f32.mrf.mxu0
        %592 = vmatprep.mubr.f32.mxu0 0.0
        %593 = vmatmul.mubr.f32.gmra.mxu0 %v488
        %v594 = vpop.f32.mrf.mxu0
        %v595 = vadd.f32 %v470, %v594
        %v596 = vpop.f32.mrf.mxu0
        %597 = vdwg.mxu0
        %s598 = scalar_lea.vmem %s1, 8
        %v599 = vld [vmem:[%s598] sm:$0xf]
        %v600 = vsel %vm347, %v329, 0
        %v602 = vsel %vm347, %v331, 0
        %v604 = vsel %vm347, %v333, 0
        %v606 = vsel %vm347, %v335, 0
        %v608 = vsel %vm347, %v337, 0
        %v610 = vsel %vm347, %v339, 0
        %v612 = vsel %vm347, %v341, 0
        %v615 = vsel %vm347, %v343, 0
        %v618 = vsel %vm364, %v599, 0
        %620 = vmatprep.subr.mxu0 0.0
        %621 = vmatpush1.msra.mxu0 0.0
        %622 = vmatprep.subr.mxu0 0.0
        %623 = vmatpush1.msra.mxu0 0.0
        %624 = vmatprep.subr.mxu0 0.0
        %625 = vmatpush1.msra.mxu0 0.0
        %626 = vmatprep.subr.mxu0 0.0
        %627 = vmatpush1.msra.mxu0 0.0
        %628 = vmatprep.subr.mxu0 0.0
        %629 = vmatpush1.msra.mxu0 0.0
        %630 = vmatprep.subr.mxu0 0.0
        %631 = vmatpush1.msra.mxu0 0.0
        %632 = vmatprep.subr.mxu0 0.0
        %633 = vmatpush1.msra.mxu0 0.0
        %634 = vmatprep.subr.mxu0 0.0
        %635 = vmatpush1.msra.mxu0 0.0
        %636 = vmatprep.subr.mxu0 0.0
        %637 = vmatpush1.msra.mxu0 0.0
        %638 = vmatprep.subr.mxu0 0.0
        %639 = vmatpush1.msra.mxu0 0.0
        %640 = vmatprep.subr.mxu0 0.0
        %641 = vmatpush1.msra.mxu0 0.0
        %642 = vmatprep.subr.mxu0 0.0
        %643 = vmatpush1.msra.mxu0 0.0
        %644 = vmatprep.subr.mxu0 0.0
        %645 = vmatpush1.msra.mxu0 0.0
        %646 = vmatprep.subr.mxu0 0.0
        %647 = vmatpush1.msra.mxu0 0.0
        %648 = vmatprep.subr.mxu0 0.0
        %649 = vmatpush1.msra.mxu0 0.0
        %650 = vmatprep.subr.mxu0 0.0
        %651 = vmatpush1.msra.mxu0 %v618
        %652 = vmatprep.subr.mxu0 0.0
        %653 = vmatpush2.msra.mxu0 0.0
        %654 = vmatprep.subr.mxu0 0.0
        %655 = vmatpush2.msra.mxu0 0.0
        %656 = vmatprep.subr.mxu0 0.0
        %657 = vmatpush2.msra.mxu0 0.0
        %658 = vmatprep.subr.mxu0 0.0
        %659 = vmatpush2.msra.mxu0 0.0
        %660 = vmatprep.subr.mxu0 0.0
        %661 = vmatpush2.msra.mxu0 0.0
        %662 = vmatprep.subr.mxu0 0.0
        %663 = vmatpush2.msra.mxu0 0.0
        %664 = vmatprep.subr.mxu0 0.0
        %665 = vmatpush2.msra.mxu0 0.0
        %666 = vmatprep.subr.mxu0 0.0
        %667 = vmatpush2.msra.mxu0 0.0
        %668 = vmatprep.subr.mxu0 0.0
        %669 = vmatpush2.msra.mxu0 0.0
        %670 = vmatprep.subr.mxu0 0.0
        %671 = vmatpush2.msra.mxu0 0.0
        %672 = vmatprep.subr.mxu0 0.0
        %673 = vmatpush2.msra.mxu0 0.0
        %674 = vmatprep.subr.mxu0 0.0
        %675 = vmatpush2.msra.mxu0 0.0
        %676 = vmatprep.subr.mxu0 0.0
        %677 = vmatpush2.msra.mxu0 0.0
        %678 = vmatprep.subr.mxu0 0.0
        %679 = vmatpush2.msra.mxu0 0.0
        %680 = vmatprep.subr.mxu0 0.0
        %681 = vmatpush2.msra.mxu0 0.0
        %682 = vmatprep.subr.mxu0 0.0
        %683 = vmatpush2.msra.mxu0 0.0
        %684 = vmatprep.mubr.f32.mxu0 0.0
        %685 = vmatmul.mubr.f32.gmra.mxu0 %v600
        %v686 = vpop.f32.mrf.mxu0
        %v687 = vadd.f32 0.0, %v686
        %v688 = vpop.f32.mrf.mxu0
        %689 = vmatprep.mubr.f32.mxu0 0.0
        %690 = vmatmul.mubr.f32.gmra.mxu0 %v602
        %v691 = vpop.f32.mrf.mxu0
        %v692 = vadd.f32 0.0, %v691
        %v693 = vpop.f32.mrf.mxu0
        %694 = vmatprep.mubr.f32.mxu0 0.0
        %695 = vmatmul.mubr.f32.gmra.mxu0 %v604
        %v696 = vpop.f32.mrf.mxu0
        %v697 = vadd.f32 0.0, %v696
        %v698 = vpop.f32.mrf.mxu0
        %699 = vmatprep.mubr.f32.mxu0 0.0
        %700 = vmatmul.mubr.f32.gmra.mxu0 %v606
        %v701 = vpop.f32.mrf.mxu0
        %v702 = vadd.f32 0.0, %v701
        %v703 = vpop.f32.mrf.mxu0
        %704 = vmatprep.mubr.f32.mxu0 0.0
        %705 = vmatmul.mubr.f32.gmra.mxu0 %v608
        %v706 = vpop.f32.mrf.mxu0
        %v707 = vadd.f32 0.0, %v706
        %v708 = vpop.f32.mrf.mxu0
        %709 = vmatprep.mubr.f32.mxu0 0.0
        %710 = vmatmul.mubr.f32.gmra.mxu0 %v610
        %v711 = vpop.f32.mrf.mxu0
        %v712 = vadd.f32 0.0, %v711
        %v713 = vpop.f32.mrf.mxu0
        %714 = vmatprep.mubr.f32.mxu0 0.0
        %715 = vmatmul.mubr.f32.gmra.mxu0 %v612
        %v716 = vpop.f32.mrf.mxu0
        %v717 = vadd.f32 0.0, %v716
        %v718 = vpop.f32.mrf.mxu0
        %719 = vmatprep.mubr.f32.mxu0 0.0
        %720 = vmatmul.mubr.f32.gmra.mxu0 %v615
        %v721 = vpop.f32.mrf.mxu0
        %v722 = vadd.f32 0.0, %v721
        %v723 = vpop.f32.mrf.mxu0
        %724 = vdwg.mxu0
        %v725 = vadd.f32 %v560, %v687
        %v726 = vadd.f32 %v565, %v692
        %v727 = vadd.f32 %v570, %v697
        %v728 = vadd.f32 %v575, %v702
        %v729 = vadd.f32 %v580, %v707
        %v730 = vadd.f32 %v585, %v712
        %v731 = vadd.f32 %v590, %v717
        %v732 = vadd.f32 %v595, %v722
        %v733 = vld [vmem:[%s2] sm:$0x1]
        %v735 = vlaneseq
        %v736 = vshrl.u32 %v735, 7
        %v737 = vsub.s32 0, %v736
        %v738 = vrot.slane %v733, %v737
        %v740 = vadd.f32 %v725, %v738
        %v741 = vadd.f32 %v726, %v738
        %v742 = vadd.f32 %v727, %v738
        %v743 = vadd.f32 %v728, %v738
        %v744 = vadd.f32 %v729, %v738
        %v745 = vadd.f32 %v730, %v738
        %v746 = vadd.f32 %v731, %v738
        %v747 = vadd.f32 %v732, %v738
        %v748 = vmax.f32 %v740, 0.0
        %v749 = vmax.f32 %v741, 0.0
        %v750 = vmax.f32 %v742, 0.0
        %v751 = vmax.f32 %v743, 0.0
        %v752 = vmax.f32 %v744, 0.0
        %v753 = vmax.f32 %v745, 0.0
        %v754 = vmax.f32 %v746, 0.0
        %v755 = vmax.f32 %v747, 0.0
        %v764 = vcombine.high %v748, %v748
        %v766 = vunpack.c.l.s4 1983009808
        %v767 = vunpack.c.0.s8 %v766
        %v768 = vlaneseq
        %v769 = vshrl.u32 %v768, 7
        %v770 = vsub.s32 %v767, %v769
        %v771 = vrot.slane %v748, %v770
        %v773 = vunpack.c.l.s4 1983009808
        %v774 = vunpack.c.0.s8 %v773
        %v775 = vlaneseq
        %v776 = vshrl.u32 %v775, 7
        %v777 = vsub.s32 %v774, %v776
        %v778 = vrot.slane %v764, %v777
        %v779 = vcombine.high %v771, %v771
        %v780 = vcombine.high %v778, %v778
        %v781 = vcombine.high %v749, %v749
        %v783 = vunpack.c.l.s4 1983009808
        %v784 = vunpack.c.0.s8 %v783
        %v785 = vlaneseq
        %v786 = vshrl.u32 %v785, 7
        %v787 = vsub.s32 %v784, %v786
        %v788 = vrot.slane %v749, %v787
        %v790 = vunpack.c.l.s4 1983009808
        %v791 = vunpack.c.0.s8 %v790
        %v792 = vlaneseq
        %v793 = vshrl.u32 %v792, 7
        %v794 = vsub.s32 %v791, %v793
        %v795 = vrot.slane %v781, %v794
        %v796 = vcombine.high %v788, %v788
        %v797 = vcombine.high %v795, %v795
        %v798 = vcombine.high %v750, %v750
        %v800 = vunpack.c.l.s4 1983009808
        %v801 = vunpack.c.0.s8 %v800
        %v802 = vlaneseq
        %v803 = vshrl.u32 %v802, 7
        %v804 = vsub.s32 %v801, %v803
        %v805 = vrot.slane %v750, %v804
        %v807 = vunpack.c.l.s4 1983009808
        %v808 = vunpack.c.0.s8 %v807
        %v809 = vlaneseq
        %v810 = vshrl.u32 %v809, 7
        %v811 = vsub.s32 %v808, %v810
        %v812 = vrot.slane %v798, %v811
        %v813 = vcombine.high %v805, %v805
        %v814 = vcombine.high %v812, %v812
        %v815 = vcombine.high %v751, %v751
        %v817 = vunpack.c.l.s4 1983009808
        %v818 = vunpack.c.0.s8 %v817
        %v819 = vlaneseq
        %v820 = vshrl.u32 %v819, 7
        %v821 = vsub.s32 %v818, %v820
        %v822 = vrot.slane %v751, %v821
        %v824 = vunpack.c.l.s4 1983009808
        %v825 = vunpack.c.0.s8 %v824
        %v826 = vlaneseq
        %v827 = vshrl.u32 %v826, 7
        %v828 = vsub.s32 %v825, %v827
        %v829 = vrot.slane %v815, %v828
        %v830 = vcombine.high %v822, %v822
        %v831 = vcombine.high %v829, %v829
        %v832 = vcombine.high %v752, %v752
        %v834 = vunpack.c.l.s4 1983009808
        %v835 = vunpack.c.0.s8 %v834
        %v836 = vlaneseq
        %v837 = vshrl.u32 %v836, 7
        %v838 = vsub.s32 %v835, %v837
        %v839 = vrot.slane %v752, %v838
        %v841 = vunpack.c.l.s4 1983009808
        %v842 = vunpack.c.0.s8 %v841
        %v843 = vlaneseq
        %v844 = vshrl.u32 %v843, 7
        %v845 = vsub.s32 %v842, %v844
        %v846 = vrot.slane %v832, %v845
        %v847 = vcombine.high %v839, %v839
        %v848 = vcombine.high %v846, %v846
        %v849 = vcombine.high %v753, %v753
        %v851 = vunpack.c.l.s4 1983009808
        %v852 = vunpack.c.0.s8 %v851
        %v853 = vlaneseq
        %v854 = vshrl.u32 %v853, 7
        %v855 = vsub.s32 %v852, %v854
        %v856 = vrot.slane %v753, %v855
        %v858 = vunpack.c.l.s4 1983009808
        %v859 = vunpack.c.0.s8 %v858
        %v860 = vlaneseq
        %v861 = vshrl.u32 %v860, 7
        %v862 = vsub.s32 %v859, %v861
        %v863 = vrot.slane %v849, %v862
        %v864 = vcombine.high %v856, %v856
        %v865 = vcombine.high %v863, %v863
        %v866 = vcombine.high %v754, %v754
        %v868 = vunpack.c.l.s4 1983009808
        %v869 = vunpack.c.0.s8 %v868
        %v870 = vlaneseq
        %v871 = vshrl.u32 %v870, 7
        %v872 = vsub.s32 %v869, %v871
        %v873 = vrot.slane %v754, %v872
        %v875 = vunpack.c.l.s4 1983009808
        %v876 = vunpack.c.0.s8 %v875
        %v877 = vlaneseq
        %v878 = vshrl.u32 %v877, 7
        %v879 = vsub.s32 %v876, %v878
        %v880 = vrot.slane %v866, %v879
        %v881 = vcombine.high %v873, %v873
        %v882 = vcombine.high %v880, %v880
        %v883 = vcombine.high %v755, %v755
        %v885 = vunpack.c.l.s4 1983009808
        %v886 = vunpack.c.0.s8 %v885
        %v887 = vlaneseq
        %v888 = vshrl.u32 %v887, 7
        %v889 = vsub.s32 %v886, %v888
        %v890 = vrot.slane %v755, %v889
        %v892 = vunpack.c.l.s4 1983009808
        %v893 = vunpack.c.0.s8 %v892
        %v894 = vlaneseq
        %v895 = vshrl.u32 %v894, 7
        %v896 = vsub.s32 %v893, %v895
        %v897 = vrot.slane %v883, %v896
        %v898 = vcombine.high %v890, %v890
        %v899 = vcombine.high %v897, %v897
        %vm932 = vcmask 254976
        %v933 = vsel %vm932, %v771, -inf
        %v934 = vrot.slane %v933, 4
        %v935 = vmax.f32 %v933, %v934
        %v936 = vrot.slane %v935, 2
        %v937 = vmax.f32 %v935, %v936
        %v938 = vrot.slane %v937, 1
        %v939 = vmax.f32 %v937, %v938
        %v940 = vsel %vm932, %v779, -inf
        %v941 = vrot.slane %v940, 4
        %v942 = vmax.f32 %v940, %v941
        %v943 = vrot.slane %v942, 2
        %v944 = vmax.f32 %v942, %v943
        %v945 = vrot.slane %v944, 1
        %v946 = vmax.f32 %v944, %v945
        %v947 = vsel %vm932, %v778, -inf
        %v948 = vrot.slane %v947, 4
        %v949 = vmax.f32 %v947, %v948
        %v950 = vrot.slane %v949, 2
        %v951 = vmax.f32 %v949, %v950
        %v952 = vrot.slane %v951, 1
        %v953 = vmax.f32 %v951, %v952
        %v954 = vsel %vm932, %v780, -inf
        %v955 = vrot.slane %v954, 4
        %v956 = vmax.f32 %v954, %v955
        %v957 = vrot.slane %v956, 2
        %v958 = vmax.f32 %v956, %v957
        %v959 = vrot.slane %v958, 1
        %v960 = vmax.f32 %v958, %v959
        %v961 = vsel %vm932, %v788, -inf
        %v962 = vrot.slane %v961, 4
        %v963 = vmax.f32 %v961, %v962
        %v964 = vrot.slane %v963, 2
        %v965 = vmax.f32 %v963, %v964
        %v966 = vrot.slane %v965, 1
        %v967 = vmax.f32 %v965, %v966
        %v968 = vsel %vm932, %v796, -inf
        %v969 = vrot.slane %v968, 4
        %v970 = vmax.f32 %v968, %v969
        %v971 = vrot.slane %v970, 2
        %v972 = vmax.f32 %v970, %v971
        %v973 = vrot.slane %v972, 1
        %v974 = vmax.f32 %v972, %v973
        %v975 = vsel %vm932, %v795, -inf
        %v976 = vrot.slane %v975, 4
        %v977 = vmax.f32 %v975, %v976
        %v978 = vrot.slane %v977, 2
        %v979 = vmax.f32 %v977, %v978
        %v980 = vrot.slane %v979, 1
        %v981 = vmax.f32 %v979, %v980
        %v982 = vsel %vm932, %v797, -inf
        %v983 = vrot.slane %v982, 4
        %v984 = vmax.f32 %v982, %v983
        %v985 = vrot.slane %v984, 2
        %v986 = vmax.f32 %v984, %v985
        %v987 = vrot.slane %v986, 1
        %v988 = vmax.f32 %v986, %v987
        %v989 = vsel %vm932, %v805, -inf
        %v990 = vrot.slane %v989, 4
        %v991 = vmax.f32 %v989, %v990
        %v992 = vrot.slane %v991, 2
        %v993 = vmax.f32 %v991, %v992
        %v994 = vrot.slane %v993, 1
        %v995 = vmax.f32 %v993, %v994
        %v996 = vsel %vm932, %v813, -inf
        %v997 = vrot.slane %v996, 4
        %v998 = vmax.f32 %v996, %v997
        %v999 = vrot.slane %v998, 2
        %v1000 = vmax.f32 %v998, %v999
        %v1001 = vrot.slane %v1000, 1
        %v1002 = vmax.f32 %v1000, %v1001
        %v1003 = vsel %vm932, %v812, -inf
        %v1004 = vrot.slane %v1003, 4
        %v1005 = vmax.f32 %v1003, %v1004
        %v1006 = vrot.slane %v1005, 2
        %v1007 = vmax.f32 %v1005, %v1006
        %v1008 = vrot.slane %v1007, 1
        %v1009 = vmax.f32 %v1007, %v1008
        %v1010 = vsel %vm932, %v814, -inf
        %v1011 = vrot.slane %v1010, 4
        %v1012 = vmax.f32 %v1010, %v1011
        %v1013 = vrot.slane %v1012, 2
        %v1014 = vmax.f32 %v1012, %v1013
        %v1015 = vrot.slane %v1014, 1
        %v1016 = vmax.f32 %v1014, %v1015
        %v1017 = vsel %vm932, %v822, -inf
        %v1018 = vrot.slane %v1017, 4
        %v1019 = vmax.f32 %v1017, %v1018
        %v1020 = vrot.slane %v1019, 2
        %v1021 = vmax.f32 %v1019, %v1020
        %v1022 = vrot.slane %v1021, 1
        %v1023 = vmax.f32 %v1021, %v1022
        %v1024 = vsel %vm932, %v830, -inf
        %v1025 = vrot.slane %v1024, 4
        %v1026 = vmax.f32 %v1024, %v1025
        %v1027 = vrot.slane %v1026, 2
        %v1028 = vmax.f32 %v1026, %v1027
        %v1029 = vrot.slane %v1028, 1
        %v1030 = vmax.f32 %v1028, %v1029
        %v1031 = vsel %vm932, %v829, -inf
        %v1032 = vrot.slane %v1031, 4
        %v1033 = vmax.f32 %v1031, %v1032
        %v1034 = vrot.slane %v1033, 2
        %v1035 = vmax.f32 %v1033, %v1034
        %v1036 = vrot.slane %v1035, 1
        %v1037 = vmax.f32 %v1035, %v1036
        %v1038 = vsel %vm932, %v831, -inf
        %v1039 = vrot.slane %v1038, 4
        %v1040 = vmax.f32 %v1038, %v1039
        %v1041 = vrot.slane %v1040, 2
        %v1042 = vmax.f32 %v1040, %v1041
        %v1043 = vrot.slane %v1042, 1
        %v1044 = vmax.f32 %v1042, %v1043
        %v1045 = vsel %vm932, %v839, -inf
        %v1046 = vrot.slane %v1045, 4
        %v1047 = vmax.f32 %v1045, %v1046
        %v1048 = vrot.slane %v1047, 2
        %v1049 = vmax.f32 %v1047, %v1048
        %v1050 = vrot.slane %v1049, 1
        %v1051 = vmax.f32 %v1049, %v1050
        %v1052 = vsel %vm932, %v847, -inf
        %v1053 = vrot.slane %v1052, 4
        %v1054 = vmax.f32 %v1052, %v1053
        %v1055 = vrot.slane %v1054, 2
        %v1056 = vmax.f32 %v1054, %v1055
        %v1057 = vrot.slane %v1056, 1
        %v1058 = vmax.f32 %v1056, %v1057
        %v1059 = vsel %vm932, %v846, -inf
        %v1060 = vrot.slane %v1059, 4
        %v1061 = vmax.f32 %v1059, %v1060
        %v1062 = vrot.slane %v1061, 2
        %v1063 = vmax.f32 %v1061, %v1062
        %v1064 = vrot.slane %v1063, 1
        %v1065 = vmax.f32 %v1063, %v1064
        %v1066 = vsel %vm932, %v848, -inf
        %v1067 = vrot.slane %v1066, 4
        %v1068 = vmax.f32 %v1066, %v1067
        %v1069 = vrot.slane %v1068, 2
        %v1070 = vmax.f32 %v1068, %v1069
        %v1071 = vrot.slane %v1070, 1
        %v1072 = vmax.f32 %v1070, %v1071
        %v1073 = vsel %vm932, %v856, -inf
        %v1074 = vrot.slane %v1073, 4
        %v1075 = vmax.f32 %v1073, %v1074
        %v1076 = vrot.slane %v1075, 2
        %v1077 = vmax.f32 %v1075, %v1076
        %v1078 = vrot.slane %v1077, 1
        %v1079 = vmax.f32 %v1077, %v1078
        %v1080 = vsel %vm932, %v864, -inf
        %v1081 = vrot.slane %v1080, 4
        %v1082 = vmax.f32 %v1080, %v1081
        %v1083 = vrot.slane %v1082, 2
        %v1084 = vmax.f32 %v1082, %v1083
        %v1085 = vrot.slane %v1084, 1
        %v1086 = vmax.f32 %v1084, %v1085
        %v1087 = vsel %vm932, %v863, -inf
        %v1088 = vrot.slane %v1087, 4
        %v1089 = vmax.f32 %v1087, %v1088
        %v1090 = vrot.slane %v1089, 2
        %v1091 = vmax.f32 %v1089, %v1090
        %v1092 = vrot.slane %v1091, 1
        %v1093 = vmax.f32 %v1091, %v1092
        %v1094 = vsel %vm932, %v865, -inf
        %v1095 = vrot.slane %v1094, 4
        %v1096 = vmax.f32 %v1094, %v1095
        %v1097 = vrot.slane %v1096, 2
        %v1098 = vmax.f32 %v1096, %v1097
        %v1099 = vrot.slane %v1098, 1
        %v1100 = vmax.f32 %v1098, %v1099
        %v1101 = vsel %vm932, %v873, -inf
        %v1102 = vrot.slane %v1101, 4
        %v1103 = vmax.f32 %v1101, %v1102
        %v1104 = vrot.slane %v1103, 2
        %v1105 = vmax.f32 %v1103, %v1104
        %v1106 = vrot.slane %v1105, 1
        %v1107 = vmax.f32 %v1105, %v1106
        %v1108 = vsel %vm932, %v881, -inf
        %v1109 = vrot.slane %v1108, 4
        %v1110 = vmax.f32 %v1108, %v1109
        %v1111 = vrot.slane %v1110, 2
        %v1112 = vmax.f32 %v1110, %v1111
        %v1113 = vrot.slane %v1112, 1
        %v1114 = vmax.f32 %v1112, %v1113
        %v1115 = vsel %vm932, %v880, -inf
        %v1116 = vrot.slane %v1115, 4
        %v1117 = vmax.f32 %v1115, %v1116
        %v1118 = vrot.slane %v1117, 2
        %v1119 = vmax.f32 %v1117, %v1118
        %v1120 = vrot.slane %v1119, 1
        %v1121 = vmax.f32 %v1119, %v1120
        %v1122 = vsel %vm932, %v882, -inf
        %v1123 = vrot.slane %v1122, 4
        %v1124 = vmax.f32 %v1122, %v1123
        %v1125 = vrot.slane %v1124, 2
        %v1126 = vmax.f32 %v1124, %v1125
        %v1127 = vrot.slane %v1126, 1
        %v1128 = vmax.f32 %v1126, %v1127
        %v1129 = vsel %vm932, %v890, -inf
        %v1130 = vrot.slane %v1129, 4
        %v1131 = vmax.f32 %v1129, %v1130
        %v1132 = vrot.slane %v1131, 2
        %v1133 = vmax.f32 %v1131, %v1132
        %v1134 = vrot.slane %v1133, 1
        %v1135 = vmax.f32 %v1133, %v1134
        %v1136 = vsel %vm932, %v898, -inf
        %v1137 = vrot.slane %v1136, 4
        %v1138 = vmax.f32 %v1136, %v1137
        %v1139 = vrot.slane %v1138, 2
        %v1140 = vmax.f32 %v1138, %v1139
        %v1141 = vrot.slane %v1140, 1
        %v1142 = vmax.f32 %v1140, %v1141
        %v1143 = vsel %vm932, %v897, -inf
        %v1144 = vrot.slane %v1143, 4
        %v1145 = vmax.f32 %v1143, %v1144
        %v1146 = vrot.slane %v1145, 2
        %v1147 = vmax.f32 %v1145, %v1146
        %v1148 = vrot.slane %v1147, 1
        %v1149 = vmax.f32 %v1147, %v1148
        %v1150 = vsel %vm932, %v899, -inf
        %v1151 = vrot.slane %v1150, 4
        %v1152 = vmax.f32 %v1150, %v1151
        %v1153 = vrot.slane %v1152, 2
        %v1154 = vmax.f32 %v1152, %v1153
        %v1155 = vrot.slane %v1154, 1
        %v1156 = vmax.f32 %v1154, %v1155
        %vm1188 = vcmask 1042434
        %v1189 = vsel %vm1188, %v946, %v939
        %vm1190 = vcmask 1043459
        %v1191 = vsel %vm1190, %v953, %v1189
        %vm1192 = vcmask 1044484
        %v1193 = vsel %vm1192, %v960, %v1191
        %vm1194 = vcmask 1045509
        %v1195 = vsel %vm1194, %v967, %v1193
        %vm1196 = vcmask 1046534
        %v1197 = vsel %vm1196, %v974, %v1195
        %vm1198 = vcmask 1047559
        %v1199 = vsel %vm1198, %v981, %v1197
        %vm1200 = vcmask 1041409
        %v1201 = vsel %vm1200, %v995, %v988
        %v1202 = vsel %vm1188, %v1002, %v1201
        %v1203 = vsel %vm1190, %v1009, %v1202
        %v1204 = vsel %vm1192, %v1016, %v1203
        %v1205 = vsel %vm1194, %v1023, %v1204
        %v1206 = vsel %vm1196, %v1030, %v1205
        %v1207 = vsel %vm1198, %v1037, %v1206
        %v1208 = vsel %vm1200, %v1051, %v1044
        %v1209 = vsel %vm1188, %v1058, %v1208
        %v1210 = vsel %vm1190, %v1065, %v1209
        %v1211 = vsel %vm1192, %v1072, %v1210
        %v1212 = vsel %vm1194, %v1079, %v1211
        %v1213 = vsel %vm1196, %v1086, %v1212
        %v1214 = vsel %vm1198, %v1093, %v1213
        %v1215 = vsel %vm1200, %v1107, %v1100
        %v1216 = vsel %vm1188, %v1114, %v1215
        %v1217 = vsel %vm1190, %v1121, %v1216
        %v1218 = vsel %vm1192, %v1128, %v1217
        %v1219 = vsel %vm1194, %v1135, %v1218
        %v1220 = vsel %vm1196, %v1142, %v1219
        %v1221 = vsel %vm1198, %v1149, %v1220
        %v1223 = vsel %vm308, 0.0, %v1199
        %v1225 = vsel %vm1200, %v953, %v946
        %v1226 = vsel %vm1188, %v960, %v1225
        %v1227 = vsel %vm1190, %v967, %v1226
        %v1228 = vsel %vm1192, %v974, %v1227
        %v1229 = vsel %vm1194, %v981, %v1228
        %v1230 = vsel %vm1196, %v988, %v1229
        %v1231 = vsel %vm1198, %v995, %v1230
        %v1232 = vsel %vm1200, %v1009, %v1002
        %v1233 = vsel %vm1188, %v1016, %v1232
        %v1234 = vsel %vm1190, %v1023, %v1233
        %v1235 = vsel %vm1192, %v1030, %v1234
        %v1236 = vsel %vm1194, %v1037, %v1235
        %v1237 = vsel %vm1196, %v1044, %v1236
        %v1238 = vsel %vm1198, %v1051, %v1237
        %v1239 = vsel %vm1200, %v1065, %v1058
        %v1240 = vsel %vm1188, %v1072, %v1239
        %v1241 = vsel %vm1190, %v1079, %v1240
        %v1242 = vsel %vm1192, %v1086, %v1241
        %v1243 = vsel %vm1194, %v1093, %v1242
        %v1244 = vsel %vm1196, %v1100, %v1243
        %v1245 = vsel %vm1198, %v1107, %v1244
        %v1246 = vsel %vm1200, %v1121, %v1114
        %v1247 = vsel %vm1188, %v1128, %v1246
        %v1248 = vsel %vm1190, %v1135, %v1247
        %v1249 = vsel %vm1192, %v1142, %v1248
        %v1250 = vsel %vm1194, %v1149, %v1249
        %v1251 = vsel %vm1196, %v1156, %v1250
        %v1253 = vsel %vm326, %v1251, 0.0
        %v1254 = vld [vmem:[%s3] sm:$0xff]
        %v1255 = vld [vmem:[%s3 + $0x8] sm:$0xff]
        %v1256 = vld [vmem:[%s3 + $0x10] sm:$0xff]
        %v1257 = vld [vmem:[%s3 + $0x18] sm:$0xff]
        %s1258 = scalar_lea.vmem %s3, 32
        %v1259 = vld [vmem:[%s1258] sm:$0xff]
        %v1260 = vld [vmem:[%s1258 + $0x8] sm:$0xff]
        %v1261 = vld [vmem:[%s1258 + $0x10] sm:$0xff]
        %v1262 = vld [vmem:[%s1258 + $0x18] sm:$0xff]
        %v1263 = vsel %vm1200, %v946, %v939
        %v1264 = vsel %vm1188, %v953, %v1263
        %v1265 = vsel %vm1190, %v960, %v1264
        %v1266 = vsel %vm1192, %v967, %v1265
        %v1267 = vsel %vm1194, %v974, %v1266
        %v1268 = vsel %vm1196, %v981, %v1267
        %v1269 = vsel %vm1198, %v988, %v1268
        %v1270 = vsel %vm1200, %v1002, %v995
        %v1271 = vsel %vm1188, %v1009, %v1270
        %v1272 = vsel %vm1190, %v1016, %v1271
        %v1273 = vsel %vm1192, %v1023, %v1272
        %v1274 = vsel %vm1194, %v1030, %v1273
        %v1275 = vsel %vm1196, %v1037, %v1274
        %v1276 = vsel %vm1198, %v1044, %v1275
        %v1277 = vsel %vm1200, %v1058, %v1051
        %v1278 = vsel %vm1188, %v1065, %v1277
        %v1279 = vsel %vm1190, %v1072, %v1278
        %v1280 = vsel %vm1192, %v1079, %v1279
        %v1281 = vsel %vm1194, %v1086, %v1280
        %v1282 = vsel %vm1196, %v1093, %v1281
        %v1283 = vsel %vm1198, %v1100, %v1282
        %v1284 = vsel %vm1200, %v1114, %v1107
        %v1285 = vsel %vm1188, %v1121, %v1284
        %v1286 = vsel %vm1190, %v1128, %v1285
        %v1287 = vsel %vm1192, %v1135, %v1286
        %v1288 = vsel %vm1194, %v1142, %v1287
        %v1289 = vsel %vm1196, %v1149, %v1288
        %v1290 = vsel %vm1198, %v1156, %v1289
        %vm1291 = vcmask 261120
        %v1292 = vsel %vm1291, %v1269, 0
        %v1294 = vsel %vm1291, %v1276, 0
        %v1296 = vsel %vm1291, %v1283, 0
        %v1298 = vsel %vm1291, %v1290, 0
        %1300 = vmatprep.subr.mxu0 0.0
        %1301 = vmatpush1.msra.mxu0 0.0
        %1302 = vmatprep.subr.mxu0 0.0
        %1303 = vmatpush1.msra.mxu0 0.0
        %1304 = vmatprep.subr.mxu0 0.0
        %1305 = vmatpush1.msra.mxu0 0.0
        %1306 = vmatprep.subr.mxu0 0.0
        %1307 = vmatpush1.msra.mxu0 0.0
        %1308 = vmatprep.subr.mxu0 0.0
        %1309 = vmatpush1.msra.mxu0 0.0
        %1310 = vmatprep.subr.mxu0 0.0
        %1311 = vmatpush1.msra.mxu0 0.0
        %1312 = vmatprep.subr.mxu0 0.0
        %1313 = vmatpush1.msra.mxu0 0.0
        %1314 = vmatprep.subr.mxu0 0.0
        %1315 = vmatpush1.msra.mxu0 0.0
        %1316 = vmatprep.subr.mxu0 0.0
        %1317 = vmatpush1.msra.mxu0 0.0
        %1318 = vmatprep.subr.mxu0 0.0
        %1319 = vmatpush1.msra.mxu0 0.0
        %1320 = vmatprep.subr.mxu0 0.0
        %1321 = vmatpush1.msra.mxu0 0.0
        %1322 = vmatprep.subr.mxu0 0.0
        %1323 = vmatpush1.msra.mxu0 0.0
        %1324 = vmatprep.subr.mxu0 0.0
        %1325 = vmatpush1.msra.mxu0 %v1262
        %1326 = vmatprep.subr.mxu0 0.0
        %1327 = vmatpush1.msra.mxu0 %v1261
        %1328 = vmatprep.subr.mxu0 0.0
        %1329 = vmatpush1.msra.mxu0 %v1260
        %1330 = vmatprep.subr.mxu0 0.0
        %1331 = vmatpush1.msra.mxu0 %v1259
        %1332 = vmatprep.subr.mxu0 0.0
        %1333 = vmatpush2.msra.mxu0 0.0
        %1334 = vmatprep.subr.mxu0 0.0
        %1335 = vmatpush2.msra.mxu0 0.0
        %1336 = vmatprep.subr.mxu0 0.0
        %1337 = vmatpush2.msra.mxu0 0.0
        %1338 = vmatprep.subr.mxu0 0.0
        %1339 = vmatpush2.msra.mxu0 0.0
        %1340 = vmatprep.subr.mxu0 0.0
        %1341 = vmatpush2.msra.mxu0 0.0
        %1342 = vmatprep.subr.mxu0 0.0
        %1343 = vmatpush2.msra.mxu0 0.0
        %1344 = vmatprep.subr.mxu0 0.0
        %1345 = vmatpush2.msra.mxu0 0.0
        %1346 = vmatprep.subr.mxu0 0.0
        %1347 = vmatpush2.msra.mxu0 0.0
        %1348 = vmatprep.subr.mxu0 0.0
        %1349 = vmatpush2.msra.mxu0 0.0
        %1350 = vmatprep.subr.mxu0 0.0
        %1351 = vmatpush2.msra.mxu0 0.0
        %1352 = vmatprep.subr.mxu0 0.0
        %1353 = vmatpush2.msra.mxu0 0.0
        %1354 = vmatprep.subr.mxu0 0.0
        %1355 = vmatpush2.msra.mxu0 0.0
        %1356 = vmatprep.subr.mxu0 0.0
        %1357 = vmatpush2.msra.mxu0 0.0
        %1358 = vmatprep.subr.mxu0 0.0
        %1359 = vmatpush2.msra.mxu0 0.0
        %1360 = vmatprep.subr.mxu0 0.0
        %1361 = vmatpush2.msra.mxu0 0.0
        %1362 = vmatprep.subr.mxu0 0.0
        %1363 = vmatpush2.msra.mxu0 0.0
        %1364 = vmatprep.mubr.f32.mxu0 0.0
        %1365 = vmatmul.mubr.f32.gmra.mxu0 %v1292
        %v1366 = vpop.f32.mrf.mxu0
        %v1367 = vadd.f32 0.0, %v1366
        %v1368 = vpop.f32.mrf.mxu0
        %1369 = vmatprep.mubr.f32.mxu0 0.0
        %1370 = vmatmul.mubr.f32.gmra.mxu0 %v1294
        %v1371 = vpop.f32.mrf.mxu0
        %v1372 = vadd.f32 0.0, %v1371
        %v1373 = vpop.f32.mrf.mxu0
        %1374 = vmatprep.mubr.f32.mxu0 0.0
        %1375 = vmatmul.mubr.f32.gmra.mxu0 %v1296
        %v1376 = vpop.f32.mrf.mxu0
        %v1377 = vadd.f32 0.0, %v1376
        %v1378 = vpop.f32.mrf.mxu0
        %1379 = vmatprep.mubr.f32.mxu0 0.0
        %1380 = vmatmul.mubr.f32.gmra.mxu0 %v1298
        %v1381 = vpop.f32.mrf.mxu0
        %v1382 = vadd.f32 0.0, %v1381
        %v1383 = vpop.f32.mrf.mxu0
        %1384 = vdwg.mxu0
        %v1386 = vsel %vm1291, %v1223, 0
        %v1388 = vsel %vm1291, %v1207, 0
        %v1390 = vsel %vm1291, %v1214, 0
        %v1392 = vsel %vm1291, %v1221, 0
        %1394 = vmatprep.subr.mxu0 0.0
        %1395 = vmatpush1.msra.mxu0 0.0
        %1396 = vmatprep.subr.mxu0 0.0
        %1397 = vmatpush1.msra.mxu0 0.0
        %1398 = vmatprep.subr.mxu0 0.0
        %1399 = vmatpush1.msra.mxu0 0.0
        %1400 = vmatprep.subr.mxu0 0.0
        %1401 = vmatpush1.msra.mxu0 0.0
        %1402 = vmatprep.subr.mxu0 0.0
        %1403 = vmatpush1.msra.mxu0 0.0
        %1404 = vmatprep.subr.mxu0 0.0
        %1405 = vmatpush1.msra.mxu0 0.0
        %1406 = vmatprep.subr.mxu0 0.0
        %1407 = vmatpush1.msra.mxu0 0.0
        %1408 = vmatprep.subr.mxu0 0.0
        %1409 = vmatpush1.msra.mxu0 0.0
        %1410 = vmatprep.subr.mxu0 0.0
        %1411 = vmatpush1.msra.mxu0 0.0
        %1412 = vmatprep.subr.mxu0 0.0
        %1413 = vmatpush1.msra.mxu0 0.0
        %1414 = vmatprep.subr.mxu0 0.0
        %1415 = vmatpush1.msra.mxu0 0.0
        %1416 = vmatprep.subr.mxu0 0.0
        %1417 = vmatpush1.msra.mxu0 0.0
        %1418 = vmatprep.subr.mxu0 0.0
        %1419 = vmatpush1.msra.mxu0 %v1257
        %1420 = vmatprep.subr.mxu0 0.0
        %1421 = vmatpush1.msra.mxu0 %v1256
        %1422 = vmatprep.subr.mxu0 0.0
        %1423 = vmatpush1.msra.mxu0 %v1255
        %1424 = vmatprep.subr.mxu0 0.0
        %1425 = vmatpush1.msra.mxu0 %v1254
        %1426 = vmatprep.subr.mxu0 0.0
        %1427 = vmatpush2.msra.mxu0 0.0
        %1428 = vmatprep.subr.mxu0 0.0
        %1429 = vmatpush2.msra.mxu0 0.0
        %1430 = vmatprep.subr.mxu0 0.0
        %1431 = vmatpush2.msra.mxu0 0.0
        %1432 = vmatprep.subr.mxu0 0.0
        %1433 = vmatpush2.msra.mxu0 0.0
        %1434 = vmatprep.subr.mxu0 0.0
        %1435 = vmatpush2.msra.mxu0 0.0
        %1436 = vmatprep.subr.mxu0 0.0
        %1437 = vmatpush2.msra.mxu0 0.0
        %1438 = vmatprep.subr.mxu0 0.0
        %1439 = vmatpush2.msra.mxu0 0.0
        %1440 = vmatprep.subr.mxu0 0.0
        %1441 = vmatpush2.msra.mxu0 0.0
        %1442 = vmatprep.subr.mxu0 0.0
        %1443 = vmatpush2.msra.mxu0 0.0
        %1444 = vmatprep.subr.mxu0 0.0
        %1445 = vmatpush2.msra.mxu0 0.0
        %1446 = vmatprep.subr.mxu0 0.0
        %1447 = vmatpush2.msra.mxu0 0.0
        %1448 = vmatprep.subr.mxu0 0.0
        %1449 = vmatpush2.msra.mxu0 0.0
        %1450 = vmatprep.subr.mxu0 0.0
        %1451 = vmatpush2.msra.mxu0 0.0
        %1452 = vmatprep.subr.mxu0 0.0
        %1453 = vmatpush2.msra.mxu0 0.0
        %1454 = vmatprep.subr.mxu0 0.0
        %1455 = vmatpush2.msra.mxu0 0.0
        %1456 = vmatprep.subr.mxu0 0.0
        %1457 = vmatpush2.msra.mxu0 0.0
        %1458 = vmatprep.mubr.f32.mxu0 0.0
        %1459 = vmatmul.mubr.f32.gmra.mxu0 %v1386
        %v1460 = vpop.f32.mrf.mxu0
        %v1461 = vadd.f32 %v1367, %v1460
        %v1462 = vpop.f32.mrf.mxu0
        %1463 = vmatprep.mubr.f32.mxu0 0.0
        %1464 = vmatmul.mubr.f32.gmra.mxu0 %v1388
        %v1465 = vpop.f32.mrf.mxu0
        %v1466 = vadd.f32 %v1372, %v1465
        %v1467 = vpop.f32.mrf.mxu0
        %1468 = vmatprep.mubr.f32.mxu0 0.0
        %1469 = vmatmul.mubr.f32.gmra.mxu0 %v1390
        %v1470 = vpop.f32.mrf.mxu0
        %v1471 = vadd.f32 %v1377, %v1470
        %v1472 = vpop.f32.mrf.mxu0
        %1473 = vmatprep.mubr.f32.mxu0 0.0
        %1474 = vmatmul.mubr.f32.gmra.mxu0 %v1392
        %v1475 = vpop.f32.mrf.mxu0
        %v1476 = vadd.f32 %v1382, %v1475
        %v1477 = vpop.f32.mrf.mxu0
        %1478 = vdwg.mxu0
        %s1479 = scalar_lea.vmem %s3, 64
        %v1480 = vld [vmem:[%s1479] sm:$0xff]
        %v1481 = vld [vmem:[%s1479 + $0x8] sm:$0xff]
        %v1482 = vld [vmem:[%s1479 + $0x10] sm:$0xff]
        %v1483 = vld [vmem:[%s1479 + $0x18] sm:$0xff]
        %v1484 = vsel %vm1291, %v1231, 0
        %v1486 = vsel %vm1291, %v1238, 0
        %v1488 = vsel %vm1291, %v1245, 0
        %v1491 = vsel %vm1291, %v1253, 0
        %1493 = vmatprep.subr.mxu0 0.0
        %1494 = vmatpush1.msra.mxu0 0.0
        %1495 = vmatprep.subr.mxu0 0.0
        %1496 = vmatpush1.msra.mxu0 0.0
        %1497 = vmatprep.subr.mxu0 0.0
        %1498 = vmatpush1.msra.mxu0 0.0
        %1499 = vmatprep.subr.mxu0 0.0
        %1500 = vmatpush1.msra.mxu0 0.0
        %1501 = vmatprep.subr.mxu0 0.0
        %1502 = vmatpush1.msra.mxu0 0.0
        %1503 = vmatprep.subr.mxu0 0.0
        %1504 = vmatpush1.msra.mxu0 0.0
        %1505 = vmatprep.subr.mxu0 0.0
        %1506 = vmatpush1.msra.mxu0 0.0
        %1507 = vmatprep.subr.mxu0 0.0
        %1508 = vmatpush1.msra.mxu0 0.0
        %1509 = vmatprep.subr.mxu0 0.0
        %1510 = vmatpush1.msra.mxu0 0.0
        %1511 = vmatprep.subr.mxu0 0.0
        %1512 = vmatpush1.msra.mxu0 0.0
        %1513 = vmatprep.subr.mxu0 0.0
        %1514 = vmatpush1.msra.mxu0 0.0
        %1515 = vmatprep.subr.mxu0 0.0
        %1516 = vmatpush1.msra.mxu0 0.0
        %1517 = vmatprep.subr.mxu0 0.0
        %1518 = vmatpush1.msra.mxu0 %v1483
        %1519 = vmatprep.subr.mxu0 0.0
        %1520 = vmatpush1.msra.mxu0 %v1482
        %1521 = vmatprep.subr.mxu0 0.0
        %1522 = vmatpush1.msra.mxu0 %v1481
        %1523 = vmatprep.subr.mxu0 0.0
        %1524 = vmatpush1.msra.mxu0 %v1480
        %1525 = vmatprep.subr.mxu0 0.0
        %1526 = vmatpush2.msra.mxu0 0.0
        %1527 = vmatprep.subr.mxu0 0.0
        %1528 = vmatpush2.msra.mxu0 0.0
        %1529 = vmatprep.subr.mxu0 0.0
        %1530 = vmatpush2.msra.mxu0 0.0
        %1531 = vmatprep.subr.mxu0 0.0
        %1532 = vmatpush2.msra.mxu0 0.0
        %1533 = vmatprep.subr.mxu0 0.0
        %1534 = vmatpush2.msra.mxu0 0.0
        %1535 = vmatprep.subr.mxu0 0.0
        %1536 = vmatpush2.msra.mxu0 0.0
        %1537 = vmatprep.subr.mxu0 0.0
        %1538 = vmatpush2.msra.mxu0 0.0
        %1539 = vmatprep.subr.mxu0 0.0
        %1540 = vmatpush2.msra.mxu0 0.0
        %1541 = vmatprep.subr.mxu0 0.0
        %1542 = vmatpush2.msra.mxu0 0.0
        %1543 = vmatprep.subr.mxu0 0.0
        %1544 = vmatpush2.msra.mxu0 0.0
        %1545 = vmatprep.subr.mxu0 0.0
        %1546 = vmatpush2.msra.mxu0 0.0
        %1547 = vmatprep.subr.mxu0 0.0
        %1548 = vmatpush2.msra.mxu0 0.0
        %1549 = vmatprep.subr.mxu0 0.0
        %1550 = vmatpush2.msra.mxu0 0.0
        %1551 = vmatprep.subr.mxu0 0.0
        %1552 = vmatpush2.msra.mxu0 0.0
        %1553 = vmatprep.subr.mxu0 0.0
        %1554 = vmatpush2.msra.mxu0 0.0
        %1555 = vmatprep.subr.mxu0 0.0
        %1556 = vmatpush2.msra.mxu0 0.0
        %1557 = vmatprep.mubr.f32.mxu0 0.0
        %1558 = vmatmul.mubr.f32.gmra.mxu0 %v1484
        %v1559 = vpop.f32.mrf.mxu0
        %v1560 = vadd.f32 0.0, %v1559
        %v1561 = vpop.f32.mrf.mxu0
        %1562 = vmatprep.mubr.f32.mxu0 0.0
        %1563 = vmatmul.mubr.f32.gmra.mxu0 %v1486
        %v1564 = vpop.f32.mrf.mxu0
        %v1565 = vadd.f32 0.0, %v1564
        %v1566 = vpop.f32.mrf.mxu0
        %1567 = vmatprep.mubr.f32.mxu0 0.0
        %1568 = vmatmul.mubr.f32.gmra.mxu0 %v1488
        %v1569 = vpop.f32.mrf.mxu0
        %v1570 = vadd.f32 0.0, %v1569
        %v1571 = vpop.f32.mrf.mxu0
        %1572 = vmatprep.mubr.f32.mxu0 0.0
        %1573 = vmatmul.mubr.f32.gmra.mxu0 %v1491
        %v1574 = vpop.f32.mrf.mxu0
        %v1575 = vadd.f32 0.0, %v1574
        %v1576 = vpop.f32.mrf.mxu0
        %1577 = vdwg.mxu0
        %v1578 = vadd.f32 %v1461, %v1560
        %v1579 = vadd.f32 %v1466, %v1565
        %v1580 = vadd.f32 %v1471, %v1570
        %v1581 = vadd.f32 %v1476, %v1575
        %v1582 = vld [vmem:[%s4] sm:$0x1]
        %v1584 = vlaneseq
        %v1585 = vshrl.u32 %v1584, 7
        %v1586 = vsub.s32 0, %v1585
        %v1587 = vrot.slane %v1582, %v1586
        %v1589 = vadd.f32 %v1578, %v1587
        %v1590 = vadd.f32 %v1579, %v1587
        %v1591 = vadd.f32 %v1580, %v1587
        %v1592 = vadd.f32 %v1581, %v1587
        %v1593 = vmax.f32 %v1589, 0.0
        %v1594 = vmax.f32 %v1590, 0.0
        %v1595 = vmax.f32 %v1591, 0.0
        %v1596 = vmax.f32 %v1592, 0.0
        %v1601 = vcombine.high %v1593, %v1593
        %v1603 = vunpack.c.l.s4 1983009808
        %v1604 = vunpack.c.0.s8 %v1603
        %v1605 = vlaneseq
        %v1606 = vshrl.u32 %v1605, 7
        %v1607 = vsub.s32 %v1604, %v1606
        %v1608 = vrot.slane %v1593, %v1607
        %v1610 = vunpack.c.l.s4 1983009808
        %v1611 = vunpack.c.0.s8 %v1610
        %v1612 = vlaneseq
        %v1613 = vshrl.u32 %v1612, 7
        %v1614 = vsub.s32 %v1611, %v1613
        %v1615 = vrot.slane %v1601, %v1614
        %v1616 = vcombine.high %v1608, %v1608
        %v1617 = vcombine.high %v1615, %v1615
        %v1618 = vcombine.high %v1594, %v1594
        %v1620 = vunpack.c.l.s4 1983009808
        %v1621 = vunpack.c.0.s8 %v1620
        %v1622 = vlaneseq
        %v1623 = vshrl.u32 %v1622, 7
        %v1624 = vsub.s32 %v1621, %v1623
        %v1625 = vrot.slane %v1594, %v1624
        %v1627 = vunpack.c.l.s4 1983009808
        %v1628 = vunpack.c.0.s8 %v1627
        %v1629 = vlaneseq
        %v1630 = vshrl.u32 %v1629, 7
        %v1631 = vsub.s32 %v1628, %v1630
        %v1632 = vrot.slane %v1618, %v1631
        %v1633 = vcombine.high %v1625, %v1625
        %v1634 = vcombine.high %v1632, %v1632
        %v1635 = vcombine.high %v1595, %v1595
        %v1637 = vunpack.c.l.s4 1983009808
        %v1638 = vunpack.c.0.s8 %v1637
        %v1639 = vlaneseq
        %v1640 = vshrl.u32 %v1639, 7
        %v1641 = vsub.s32 %v1638, %v1640
        %v1642 = vrot.slane %v1595, %v1641
        %v1644 = vunpack.c.l.s4 1983009808
        %v1645 = vunpack.c.0.s8 %v1644
        %v1646 = vlaneseq
        %v1647 = vshrl.u32 %v1646, 7
        %v1648 = vsub.s32 %v1645, %v1647
        %v1649 = vrot.slane %v1635, %v1648
        %v1650 = vcombine.high %v1642, %v1642
        %v1651 = vcombine.high %v1649, %v1649
        %v1652 = vcombine.high %v1596, %v1596
        %v1654 = vunpack.c.l.s4 1983009808
        %v1655 = vunpack.c.0.s8 %v1654
        %v1656 = vlaneseq
        %v1657 = vshrl.u32 %v1656, 7
        %v1658 = vsub.s32 %v1655, %v1657
        %v1659 = vrot.slane %v1596, %v1658
        %v1661 = vunpack.c.l.s4 1983009808
        %v1662 = vunpack.c.0.s8 %v1661
        %v1663 = vlaneseq
        %v1664 = vshrl.u32 %v1663, 7
        %v1665 = vsub.s32 %v1662, %v1664
        %v1666 = vrot.slane %v1652, %v1665
        %v1667 = vcombine.high %v1659, %v1659
        %v1668 = vcombine.high %v1666, %v1666
        %vm1685 = vcmask 517120
        %v1686 = vsel %vm1685, %v1608, -inf
        %v1687 = vrot.slane %v1686, 4
        %v1688 = vmax.f32 %v1686, %v1687
        %v1689 = vrot.slane %v1688, 2
        %v1690 = vmax.f32 %v1688, %v1689
        %v1691 = vrot.slane %v1690, 1
        %v1692 = vmax.f32 %v1690, %v1691
        %v1693 = vsel %vm1685, %v1616, -inf
        %v1694 = vrot.slane %v1693, 4
        %v1695 = vmax.f32 %v1693, %v1694
        %v1696 = vrot.slane %v1695, 2
        %v1697 = vmax.f32 %v1695, %v1696
        %v1698 = vrot.slane %v1697, 1
        %v1699 = vmax.f32 %v1697, %v1698
        %v1700 = vsel %vm1685, %v1615, -inf
        %v1701 = vrot.slane %v1700, 4
        %v1702 = vmax.f32 %v1700, %v1701
        %v1703 = vrot.slane %v1702, 2
        %v1704 = vmax.f32 %v1702, %v1703
        %v1705 = vrot.slane %v1704, 1
        %v1706 = vmax.f32 %v1704, %v1705
        %v1707 = vsel %vm1685, %v1617, -inf
        %v1708 = vrot.slane %v1707, 4
        %v1709 = vmax.f32 %v1707, %v1708
        %v1710 = vrot.slane %v1709, 2
        %v1711 = vmax.f32 %v1709, %v1710
        %v1712 = vrot.slane %v1711, 1
        %v1713 = vmax.f32 %v1711, %v1712
        %v1714 = vsel %vm1685, %v1625, -inf
        %v1715 = vrot.slane %v1714, 4
        %v1716 = vmax.f32 %v1714, %v1715
        %v1717 = vrot.slane %v1716, 2
        %v1718 = vmax.f32 %v1716, %v1717
        %v1719 = vrot.slane %v1718, 1
        %v1720 = vmax.f32 %v1718, %v1719
        %v1721 = vsel %vm1685, %v1633, -inf
        %v1722 = vrot.slane %v1721, 4
        %v1723 = vmax.f32 %v1721, %v1722
        %v1724 = vrot.slane %v1723, 2
        %v1725 = vmax.f32 %v1723, %v1724
        %v1726 = vrot.slane %v1725, 1
        %v1727 = vmax.f32 %v1725, %v1726
        %v1728 = vsel %vm1685, %v1632, -inf
        %v1729 = vrot.slane %v1728, 4
        %v1730 = vmax.f32 %v1728, %v1729
        %v1731 = vrot.slane %v1730, 2
        %v1732 = vmax.f32 %v1730, %v1731
        %v1733 = vrot.slane %v1732, 1
        %v1734 = vmax.f32 %v1732, %v1733
        %v1735 = vsel %vm1685, %v1634, -inf
        %v1736 = vrot.slane %v1735, 4
        %v1737 = vmax.f32 %v1735, %v1736
        %v1738 = vrot.slane %v1737, 2
        %v1739 = vmax.f32 %v1737, %v1738
        %v1740 = vrot.slane %v1739, 1
        %v1741 = vmax.f32 %v1739, %v1740
        %v1742 = vsel %vm1685, %v1642, -inf
        %v1743 = vrot.slane %v1742, 4
        %v1744 = vmax.f32 %v1742, %v1743
        %v1745 = vrot.slane %v1744, 2
        %v1746 = vmax.f32 %v1744, %v1745
        %v1747 = vrot.slane %v1746, 1
        %v1748 = vmax.f32 %v1746, %v1747
        %v1749 = vsel %vm1685, %v1650, -inf
        %v1750 = vrot.slane %v1749, 4
        %v1751 = vmax.f32 %v1749, %v1750
        %v1752 = vrot.slane %v1751, 2
        %v1753 = vmax.f32 %v1751, %v1752
        %v1754 = vrot.slane %v1753, 1
        %v1755 = vmax.f32 %v1753, %v1754
        %v1756 = vsel %vm1685, %v1649, -inf
        %v1757 = vrot.slane %v1756, 4
        %v1758 = vmax.f32 %v1756, %v1757
        %v1759 = vrot.slane %v1758, 2
        %v1760 = vmax.f32 %v1758, %v1759
        %v1761 = vrot.slane %v1760, 1
        %v1762 = vmax.f32 %v1760, %v1761
        %v1763 = vsel %vm1685, %v1651, -inf
        %v1764 = vrot.slane %v1763, 4
        %v1765 = vmax.f32 %v1763, %v1764
        %v1766 = vrot.slane %v1765, 2
        %v1767 = vmax.f32 %v1765, %v1766
        %v1768 = vrot.slane %v1767, 1
        %v1769 = vmax.f32 %v1767, %v1768
        %v1770 = vsel %vm1685, %v1659, -inf
        %v1771 = vrot.slane %v1770, 4
        %v1772 = vmax.f32 %v1770, %v1771
        %v1773 = vrot.slane %v1772, 2
        %v1774 = vmax.f32 %v1772, %v1773
        %v1775 = vrot.slane %v1774, 1
        %v1776 = vmax.f32 %v1774, %v1775
        %v1777 = vsel %vm1685, %v1667, -inf
        %v1778 = vrot.slane %v1777, 4
        %v1779 = vmax.f32 %v1777, %v1778
        %v1780 = vrot.slane %v1779, 2
        %v1781 = vmax.f32 %v1779, %v1780
        %v1782 = vrot.slane %v1781, 1
        %v1783 = vmax.f32 %v1781, %v1782
        %v1784 = vsel %vm1685, %v1666, -inf
        %v1785 = vrot.slane %v1784, 4
        %v1786 = vmax.f32 %v1784, %v1785
        %v1787 = vrot.slane %v1786, 2
        %v1788 = vmax.f32 %v1786, %v1787
        %v1789 = vrot.slane %v1788, 1
        %v1790 = vmax.f32 %v1788, %v1789
        %v1791 = vsel %vm1685, %v1668, -inf
        %v1792 = vrot.slane %v1791, 4
        %v1793 = vmax.f32 %v1791, %v1792
        %v1794 = vrot.slane %v1793, 2
        %v1795 = vmax.f32 %v1793, %v1794
        %v1796 = vrot.slane %v1795, 1
        %v1797 = vmax.f32 %v1795, %v1796
        %v1813 = vsel %vm1188, %v1699, %v1692
        %v1814 = vsel %vm1190, %v1706, %v1813
        %v1815 = vsel %vm1192, %v1713, %v1814
        %v1816 = vsel %vm1194, %v1720, %v1815
        %v1817 = vsel %vm1196, %v1727, %v1816
        %v1818 = vsel %vm1198, %v1734, %v1817
        %v1819 = vsel %vm1200, %v1748, %v1741
        %v1820 = vsel %vm1188, %v1755, %v1819
        %v1821 = vsel %vm1190, %v1762, %v1820
        %v1822 = vsel %vm1192, %v1769, %v1821
        %v1823 = vsel %vm1194, %v1776, %v1822
        %v1824 = vsel %vm1196, %v1783, %v1823
        %v1825 = vsel %vm1198, %v1790, %v1824
        %v1827 = vsel %vm308, 0.0, %v1818
        %v1829 = vsel %vm1200, %v1706, %v1699
        %v1830 = vsel %vm1188, %v1713, %v1829
        %v1831 = vsel %vm1190, %v1720, %v1830
        %v1832 = vsel %vm1192, %v1727, %v1831
        %v1833 = vsel %vm1194, %v1734, %v1832
        %v1834 = vsel %vm1196, %v1741, %v1833
        %v1835 = vsel %vm1198, %v1748, %v1834
        %v1836 = vsel %vm1200, %v1762, %v1755
        %v1837 = vsel %vm1188, %v1769, %v1836
        %v1838 = vsel %vm1190, %v1776, %v1837
        %v1839 = vsel %vm1192, %v1783, %v1838
        %v1840 = vsel %vm1194, %v1790, %v1839
        %v1841 = vsel %vm1196, %v1797, %v1840
        %v1843 = vsel %vm326, %v1841, 0.0
        %v1844 = vld [vmem:[#allocation2] sm:$0xff]
        %v1845 = vld [vmem:[#allocation2 + $0x8] sm:$0xff]
        %v1846 = vld [vmem:[#allocation2 + $0x10] sm:$0xff]
        %v1847 = vld [vmem:[#allocation2 + $0x18] sm:$0xff]
        %v1848 = vld [vmem:[#allocation2 + $0x20] sm:$0xff]
        %v1849 = vld [vmem:[#allocation2 + $0x28] sm:$0xff]
        %v1850 = vld [vmem:[#allocation2 + $0x30] sm:$0xff]
        %v1851 = vld [vmem:[#allocation2 + $0x38] sm:$0xff]
        %s1852 = scalar_lea.vmem [#allocation2], 64
        %v1853 = vld [vmem:[%s1852] sm:$0xff]
        %v1854 = vld [vmem:[%s1852 + $0x8] sm:$0xff]
        %v1855 = vld [vmem:[%s1852 + $0x10] sm:$0xff]
        %v1856 = vld [vmem:[%s1852 + $0x18] sm:$0xff]
        %v1857 = vld [vmem:[%s1852 + $0x20] sm:$0xff]
        %v1858 = vld [vmem:[%s1852 + $0x28] sm:$0xff]
        %v1859 = vld [vmem:[%s1852 + $0x30] sm:$0xff]
        %v1860 = vld [vmem:[%s1852 + $0x38] sm:$0xff]
        %v1861 = vsel %vm1200, %v1699, %v1692
        %v1862 = vsel %vm1188, %v1706, %v1861
        %v1863 = vsel %vm1190, %v1713, %v1862
        %v1864 = vsel %vm1192, %v1720, %v1863
        %v1865 = vsel %vm1194, %v1727, %v1864
        %v1866 = vsel %vm1196, %v1734, %v1865
        %v1867 = vsel %vm1198, %v1741, %v1866
        %v1868 = vsel %vm1200, %v1755, %v1748
        %v1869 = vsel %vm1188, %v1762, %v1868
        %v1870 = vsel %vm1190, %v1769, %v1869
        %v1871 = vsel %vm1192, %v1776, %v1870
        %v1872 = vsel %vm1194, %v1783, %v1871
        %v1873 = vsel %vm1196, %v1790, %v1872
        %v1874 = vsel %vm1198, %v1797, %v1873
        %vm1875 = vcmask 523264
        %v1876 = vsel %vm1875, %v1867, 0
        %v1878 = vsel %vm1875, %v1874, 0
        %1880 = vmatprep.subr.mxu0 0.0
        %1881 = vmatpush1.msra.mxu0 0.0
        %1882 = vmatprep.subr.mxu0 0.0
        %1883 = vmatpush1.msra.mxu0 0.0
        %1884 = vmatprep.subr.mxu0 0.0
        %1885 = vmatpush1.msra.mxu0 0.0
        %1886 = vmatprep.subr.mxu0 0.0
        %1887 = vmatpush1.msra.mxu0 0.0
        %1888 = vmatprep.subr.mxu0 0.0
        %1889 = vmatpush1.msra.mxu0 0.0
        %1890 = vmatprep.subr.mxu0 0.0
        %1891 = vmatpush1.msra.mxu0 0.0
        %1892 = vmatprep.subr.mxu0 0.0
        %1893 = vmatpush1.msra.mxu0 0.0
        %1894 = vmatprep.subr.mxu0 0.0
        %1895 = vmatpush1.msra.mxu0 0.0
        %1896 = vmatprep.subr.mxu0 0.0
        %1897 = vmatpush1.msra.mxu0 %v1860
        %1898 = vmatprep.subr.mxu0 0.0
        %1899 = vmatpush1.msra.mxu0 %v1859
        %1900 = vmatprep.subr.mxu0 0.0
        %1901 = vmatpush1.msra.mxu0 %v1858
        %1902 = vmatprep.subr.mxu0 0.0
        %1903 = vmatpush1.msra.mxu0 %v1857
        %1904 = vmatprep.subr.mxu0 0.0
        %1905 = vmatpush1.msra.mxu0 %v1856
        %1906 = vmatprep.subr.mxu0 0.0
        %1907 = vmatpush1.msra.mxu0 %v1855
        %1908 = vmatprep.subr.mxu0 0.0
        %1909 = vmatpush1.msra.mxu0 %v1854
        %1910 = vmatprep.subr.mxu0 0.0
        %1911 = vmatpush1.msra.mxu0 %v1853
        %1912 = vmatprep.subr.mxu0 0.0
        %1913 = vmatpush2.msra.mxu0 0.0
        %1914 = vmatprep.subr.mxu0 0.0
        %1915 = vmatpush2.msra.mxu0 0.0
        %1916 = vmatprep.subr.mxu0 0.0
        %1917 = vmatpush2.msra.mxu0 0.0
        %1918 = vmatprep.subr.mxu0 0.0
        %1919 = vmatpush2.msra.mxu0 0.0
        %1920 = vmatprep.subr.mxu0 0.0
        %1921 = vmatpush2.msra.mxu0 0.0
        %1922 = vmatprep.subr.mxu0 0.0
        %1923 = vmatpush2.msra.mxu0 0.0
        %1924 = vmatprep.subr.mxu0 0.0
        %1925 = vmatpush2.msra.mxu0 0.0
        %1926 = vmatprep.subr.mxu0 0.0
        %1927 = vmatpush2.msra.mxu0 0.0
        %1928 = vmatprep.subr.mxu0 0.0
        %1929 = vmatpush2.msra.mxu0 0.0
        %1930 = vmatprep.subr.mxu0 0.0
        %1931 = vmatpush2.msra.mxu0 0.0
        %1932 = vmatprep.subr.mxu0 0.0
        %1933 = vmatpush2.msra.mxu0 0.0
        %1934 = vmatprep.subr.mxu0 0.0
        %1935 = vmatpush2.msra.mxu0 0.0
        %1936 = vmatprep.subr.mxu0 0.0
        %1937 = vmatpush2.msra.mxu0 0.0
        %1938 = vmatprep.subr.mxu0 0.0
        %1939 = vmatpush2.msra.mxu0 0.0
        %1940 = vmatprep.subr.mxu0 0.0
        %1941 = vmatpush2.msra.mxu0 0.0
        %1942 = vmatprep.subr.mxu0 0.0
        %1943 = vmatpush2.msra.mxu0 0.0
        %1944 = vmatprep.mubr.f32.mxu0 0.0
        %1945 = vmatmul.mubr.f32.gmra.mxu0 %v1876
        %v1946 = vpop.f32.mrf.mxu0
        %v1947 = vadd.f32 0.0, %v1946
        %v1948 = vpop.f32.mrf.mxu0
        %1949 = vmatprep.mubr.f32.mxu0 0.0
        %1950 = vmatmul.mubr.f32.gmra.mxu0 %v1878
        %v1951 = vpop.f32.mrf.mxu0
        %v1952 = vadd.f32 0.0, %v1951
        %v1953 = vpop.f32.mrf.mxu0
        %1954 = vdwg.mxu0
        %v1956 = vsel %vm1875, %v1827, 0
        %v1958 = vsel %vm1875, %v1825, 0
        %1960 = vmatprep.subr.mxu0 0.0
        %1961 = vmatpush1.msra.mxu0 0.0
        %1962 = vmatprep.subr.mxu0 0.0
        %1963 = vmatpush1.msra.mxu0 0.0
        %1964 = vmatprep.subr.mxu0 0.0
        %1965 = vmatpush1.msra.mxu0 0.0
        %1966 = vmatprep.subr.mxu0 0.0
        %1967 = vmatpush1.msra.mxu0 0.0
        %1968 = vmatprep.subr.mxu0 0.0
        %1969 = vmatpush1.msra.mxu0 0.0
        %1970 = vmatprep.subr.mxu0 0.0
        %1971 = vmatpush1.msra.mxu0 0.0
        %1972 = vmatprep.subr.mxu0 0.0
        %1973 = vmatpush1.msra.mxu0 0.0
        %1974 = vmatprep.subr.mxu0 0.0
        %1975 = vmatpush1.msra.mxu0 0.0
        %1976 = vmatprep.subr.mxu0 0.0
        %1977 = vmatpush1.msra.mxu0 %v1851
        %1978 = vmatprep.subr.mxu0 0.0
        %1979 = vmatpush1.msra.mxu0 %v1850
        %1980 = vmatprep.subr.mxu0 0.0
        %1981 = vmatpush1.msra.mxu0 %v1849
        %1982 = vmatprep.subr.mxu0 0.0
        %1983 = vmatpush1.msra.mxu0 %v1848
        %1984 = vmatprep.subr.mxu0 0.0
        %1985 = vmatpush1.msra.mxu0 %v1847
        %1986 = vmatprep.subr.mxu0 0.0
        %1987 = vmatpush1.msra.mxu0 %v1846
        %1988 = vmatprep.subr.mxu0 0.0
        %1989 = vmatpush1.msra.mxu0 %v1845
        %1990 = vmatprep.subr.mxu0 0.0
        %1991 = vmatpush1.msra.mxu0 %v1844
        %1992 = vmatprep.subr.mxu0 0.0
        %1993 = vmatpush2.msra.mxu0 0.0
        %1994 = vmatprep.subr.mxu0 0.0
        %1995 = vmatpush2.msra.mxu0 0.0
        %1996 = vmatprep.subr.mxu0 0.0
        %1997 = vmatpush2.msra.mxu0 0.0
        %1998 = vmatprep.subr.mxu0 0.0
        %1999 = vmatpush2.msra.mxu0 0.0
        %2000 = vmatprep.subr.mxu0 0.0
        %2001 = vmatpush2.msra.mxu0 0.0
        %2002 = vmatprep.subr.mxu0 0.0
        %2003 = vmatpush2.msra.mxu0 0.0
        %2004 = vmatprep.subr.mxu0 0.0
        %2005 = vmatpush2.msra.mxu0 0.0
        %2006 = vmatprep.subr.mxu0 0.0
        %2007 = vmatpush2.msra.mxu0 0.0
        %2008 = vmatprep.subr.mxu0 0.0
        %2009 = vmatpush2.msra.mxu0 0.0
        %2010 = vmatprep.subr.mxu0 0.0
        %2011 = vmatpush2.msra.mxu0 0.0
        %2012 = vmatprep.subr.mxu0 0.0
        %2013 = vmatpush2.msra.mxu0 0.0
        %2014 = vmatprep.subr.mxu0 0.0
        %2015 = vmatpush2.msra.mxu0 0.0
        %2016 = vmatprep.subr.mxu0 0.0
        %2017 = vmatpush2.msra.mxu0 0.0
        %2018 = vmatprep.subr.mxu0 0.0
        %2019 = vmatpush2.msra.mxu0 0.0
        %2020 = vmatprep.subr.mxu0 0.0
        %2021 = vmatpush2.msra.mxu0 0.0
        %2022 = vmatprep.subr.mxu0 0.0
        %2023 = vmatpush2.msra.mxu0 0.0
        %2024 = vmatprep.mubr.f32.mxu0 0.0
        %2025 = vmatmul.mubr.f32.gmra.mxu0 %v1956
        %v2026 = vpop.f32.mrf.mxu0
        %v2027 = vadd.f32 %v1947, %v2026
        %v2028 = vpop.f32.mrf.mxu0
        %2029 = vmatprep.mubr.f32.mxu0 0.0
        %2030 = vmatmul.mubr.f32.gmra.mxu0 %v1958
        %v2031 = vpop.f32.mrf.mxu0
        %v2032 = vadd.f32 %v1952, %v2031
        %v2033 = vpop.f32.mrf.mxu0
        %2034 = vdwg.mxu0
        %s2035 = scalar_lea.vmem [#allocation2], 128
        %v2036 = vld [vmem:[%s2035] sm:$0xff]
        %v2037 = vld [vmem:[%s2035 + $0x8] sm:$0xff]
        %v2038 = vld [vmem:[%s2035 + $0x10] sm:$0xff]
        %v2039 = vld [vmem:[%s2035 + $0x18] sm:$0xff]
        %v2040 = vld [vmem:[%s2035 + $0x20] sm:$0xff]
        %v2041 = vld [vmem:[%s2035 + $0x28] sm:$0xff]
        %v2042 = vld [vmem:[%s2035 + $0x30] sm:$0xff]
        %v2043 = vld [vmem:[%s2035 + $0x38] sm:$0xff]
        %v2044 = vsel %vm1875, %v1835, 0
        %v2047 = vsel %vm1875, %v1843, 0
        %2049 = vmatprep.subr.mxu0 0.0
        %2050 = vmatpush1.msra.mxu0 0.0
        %2051 = vmatprep.subr.mxu0 0.0
        %2052 = vmatpush1.msra.mxu0 0.0
        %2053 = vmatprep.subr.mxu0 0.0
        %2054 = vmatpush1.msra.mxu0 0.0
        %2055 = vmatprep.subr.mxu0 0.0
        %2056 = vmatpush1.msra.mxu0 0.0
        %2057 = vmatprep.subr.mxu0 0.0
        %2058 = vmatpush1.msra.mxu0 0.0
        %2059 = vmatprep.subr.mxu0 0.0
        %2060 = vmatpush1.msra.mxu0 0.0
        %2061 = vmatprep.subr.mxu0 0.0
        %2062 = vmatpush1.msra.mxu0 0.0
        %2063 = vmatprep.subr.mxu0 0.0
        %2064 = vmatpush1.msra.mxu0 0.0
        %2065 = vmatprep.subr.mxu0 0.0
        %2066 = vmatpush1.msra.mxu0 %v2043
        %2067 = vmatprep.subr.mxu0 0.0
        %2068 = vmatpush1.msra.mxu0 %v2042
        %2069 = vmatprep.subr.mxu0 0.0
        %2070 = vmatpush1.msra.mxu0 %v2041
        %2071 = vmatprep.subr.mxu0 0.0
        %2072 = vmatpush1.msra.mxu0 %v2040
        %2073 = vmatprep.subr.mxu0 0.0
        %2074 = vmatpush1.msra.mxu0 %v2039
        %2075 = vmatprep.subr.mxu0 0.0
        %2076 = vmatpush1.msra.mxu0 %v2038
        %2077 = vmatprep.subr.mxu0 0.0
        %2078 = vmatpush1.msra.mxu0 %v2037
        %2079 = vmatprep.subr.mxu0 0.0
        %2080 = vmatpush1.msra.mxu0 %v2036
        %2081 = vmatprep.subr.mxu0 0.0
        %2082 = vmatpush2.msra.mxu0 0.0
        %2083 = vmatprep.subr.mxu0 0.0
        %2084 = vmatpush2.msra.mxu0 0.0
        %2085 = vmatprep.subr.mxu0 0.0
        %2086 = vmatpush2.msra.mxu0 0.0
        %2087 = vmatprep.subr.mxu0 0.0
        %2088 = vmatpush2.msra.mxu0 0.0
        %2089 = vmatprep.subr.mxu0 0.0
        %2090 = vmatpush2.msra.mxu0 0.0
        %2091 = vmatprep.subr.mxu0 0.0
        %2092 = vmatpush2.msra.mxu0 0.0
        %2093 = vmatprep.subr.mxu0 0.0
        %2094 = vmatpush2.msra.mxu0 0.0
        %2095 = vmatprep.subr.mxu0 0.0
        %2096 = vmatpush2.msra.mxu0 0.0
        %2097 = vmatprep.subr.mxu0 0.0
        %2098 = vmatpush2.msra.mxu0 0.0
        %2099 = vmatprep.subr.mxu0 0.0
        %2100 = vmatpush2.msra.mxu0 0.0
        %2101 = vmatprep.subr.mxu0 0.0
        %2102 = vmatpush2.msra.mxu0 0.0
        %2103 = vmatprep.subr.mxu0 0.0
        %2104 = vmatpush2.msra.mxu0 0.0
        %2105 = vmatprep.subr.mxu0 0.0
        %2106 = vmatpush2.msra.mxu0 0.0
        %2107 = vmatprep.subr.mxu0 0.0
        %2108 = vmatpush2.msra.mxu0 0.0
        %2109 = vmatprep.subr.mxu0 0.0
        %2110 = vmatpush2.msra.mxu0 0.0
        %2111 = vmatprep.subr.mxu0 0.0
        %2112 = vmatpush2.msra.mxu0 0.0
        %2113 = vmatprep.mubr.f32.mxu0 0.0
        %2114 = vmatmul.mubr.f32.gmra.mxu0 %v2044
        %v2115 = vpop.f32.mrf.mxu0
        %v2116 = vadd.f32 0.0, %v2115
        %v2117 = vpop.f32.mrf.mxu0
        %2118 = vmatprep.mubr.f32.mxu0 0.0
        %2119 = vmatmul.mubr.f32.gmra.mxu0 %v2047
        %v2120 = vpop.f32.mrf.mxu0
        %v2121 = vadd.f32 0.0, %v2120
        %v2122 = vpop.f32.mrf.mxu0
        %2123 = vdwg.mxu0
        %v2124 = vadd.f32 %v2027, %v2116
        %v2125 = vadd.f32 %v2032, %v2121
        %v2126 = vld [vmem:[%s6] sm:$0x1]
        %v2128 = vlaneseq
        %v2129 = vshrl.u32 %v2128, 7
        %v2130 = vsub.s32 0, %v2129
        %v2131 = vrot.slane %v2126, %v2130
        %v2133 = vadd.f32 %v2124, %v2131
        %v2134 = vadd.f32 %v2125, %v2131
        %v2135 = vmax.f32 %v2133, 0.0
        %v2136 = vmax.f32 %v2134, 0.0
        %v2139 = vcombine.high %v2135, %v2135
        %v2141 = vunpack.c.l.s4 1983009808
        %v2142 = vunpack.c.0.s8 %v2141
        %v2143 = vlaneseq
        %v2144 = vshrl.u32 %v2143, 7
        %v2145 = vsub.s32 %v2142, %v2144
        %v2146 = vrot.slane %v2135, %v2145
        %v2148 = vunpack.c.l.s4 1983009808
        %v2149 = vunpack.c.0.s8 %v2148
        %v2150 = vlaneseq
        %v2151 = vshrl.u32 %v2150, 7
        %v2152 = vsub.s32 %v2149, %v2151
        %v2153 = vrot.slane %v2139, %v2152
        %v2154 = vcombine.high %v2146, %v2146
        %v2155 = vcombine.high %v2153, %v2153
        %v2156 = vcombine.high %v2136, %v2136
        %v2158 = vunpack.c.l.s4 1983009808
        %v2159 = vunpack.c.0.s8 %v2158
        %v2160 = vlaneseq
        %v2161 = vshrl.u32 %v2160, 7
        %v2162 = vsub.s32 %v2159, %v2161
        %v2163 = vrot.slane %v2136, %v2162
        %v2165 = vunpack.c.l.s4 1983009808
        %v2166 = vunpack.c.0.s8 %v2165
        %v2167 = vlaneseq
        %v2168 = vshrl.u32 %v2167, 7
        %v2169 = vsub.s32 %v2166, %v2168
        %v2170 = vrot.slane %v2156, %v2169
        %v2171 = vcombine.high %v2163, %v2163
        %v2172 = vcombine.high %v2170, %v2170
        %vm2181 = vcmask 1041408
        %v2182 = vsel %vm2181, %v2146, -inf
        %v2183 = vrot.slane %v2182, 4
        %v2184 = vmax.f32 %v2182, %v2183
        %v2185 = vrot.slane %v2184, 2
        %v2186 = vmax.f32 %v2184, %v2185
        %v2187 = vrot.slane %v2186, 1
        %v2188 = vmax.f32 %v2186, %v2187
        %v2189 = vsel %vm2181, %v2154, -inf
        %v2190 = vrot.slane %v2189, 4
        %v2191 = vmax.f32 %v2189, %v2190
        %v2192 = vrot.slane %v2191, 2
        %v2193 = vmax.f32 %v2191, %v2192
        %v2194 = vrot.slane %v2193, 1
        %v2195 = vmax.f32 %v2193, %v2194
        %v2196 = vsel %vm2181, %v2153, -inf
        %v2197 = vrot.slane %v2196, 4
        %v2198 = vmax.f32 %v2196, %v2197
        %v2199 = vrot.slane %v2198, 2
        %v2200 = vmax.f32 %v2198, %v2199
        %v2201 = vrot.slane %v2200, 1
        %v2202 = vmax.f32 %v2200, %v2201
        %v2203 = vsel %vm2181, %v2155, -inf
        %v2204 = vrot.slane %v2203, 4
        %v2205 = vmax.f32 %v2203, %v2204
        %v2206 = vrot.slane %v2205, 2
        %v2207 = vmax.f32 %v2205, %v2206
        %v2208 = vrot.slane %v2207, 1
        %v2209 = vmax.f32 %v2207, %v2208
        %v2210 = vsel %vm2181, %v2163, -inf
        %v2211 = vrot.slane %v2210, 4
        %v2212 = vmax.f32 %v2210, %v2211
        %v2213 = vrot.slane %v2212, 2
        %v2214 = vmax.f32 %v2212, %v2213
        %v2215 = vrot.slane %v2214, 1
        %v2216 = vmax.f32 %v2214, %v2215
        %v2217 = vsel %vm2181, %v2171, -inf
        %v2218 = vrot.slane %v2217, 4
        %v2219 = vmax.f32 %v2217, %v2218
        %v2220 = vrot.slane %v2219, 2
        %v2221 = vmax.f32 %v2219, %v2220
        %v2222 = vrot.slane %v2221, 1
        %v2223 = vmax.f32 %v2221, %v2222
        %v2224 = vsel %vm2181, %v2170, -inf
        %v2225 = vrot.slane %v2224, 4
        %v2226 = vmax.f32 %v2224, %v2225
        %v2227 = vrot.slane %v2226, 2
        %v2228 = vmax.f32 %v2226, %v2227
        %v2229 = vrot.slane %v2228, 1
        %v2230 = vmax.f32 %v2228, %v2229
        %v2231 = vsel %vm2181, %v2172, -inf
        %v2232 = vrot.slane %v2231, 4
        %v2233 = vmax.f32 %v2231, %v2232
        %v2234 = vrot.slane %v2233, 2
        %v2235 = vmax.f32 %v2233, %v2234
        %v2236 = vrot.slane %v2235, 1
        %v2237 = vmax.f32 %v2235, %v2236
        %v2238 = vpack.c.bf16 %v2188, %v2188
        %v2239 = vpack.c.bf16 %v2195, %v2195
        %v2240 = vpack.c.bf16 %v2202, %v2202
        %v2241 = vpack.c.bf16 %v2209, %v2209
        %v2242 = vpack.c.bf16 %v2216, %v2216
        %v2243 = vpack.c.bf16 %v2223, %v2223
        %v2244 = vpack.c.bf16 %v2230, %v2230
        %v2245 = vpack.c.bf16 %v2237, %v2237
        %v2254 = vunpack.c.l.b16 %v2238
        %v2255 = vunpack.c.l.b16 %v2239
        %v2256 = vunpack.c.l.b16 %v2240
        %v2257 = vunpack.c.l.b16 %v2241
        %v2258 = vunpack.c.l.b16 %v2242
        %v2259 = vunpack.c.l.b16 %v2243
        %v2260 = vunpack.c.l.b16 %v2244
        %v2261 = vunpack.c.l.b16 %v2245
        %v2262 = vpack.c.b16 %v2254, %v2254
        %v2263 = vpack.c.b16 %v2255, %v2255
        %v2264 = vpack.c.b16 %v2256, %v2256
        %v2265 = vpack.c.b16 %v2257, %v2257
        %v2266 = vpack.c.b16 %v2258, %v2258
        %v2267 = vpack.c.b16 %v2259, %v2259
        %v2268 = vpack.c.b16 %v2260, %v2260
        %v2269 = vpack.c.b16 %v2261, %v2261
        %v2270 = vunpack.c.l.b16 %v2262
        %v2271 = vunpack.c.l.b16 %v2263
        %v2272 = vunpack.c.l.b16 %v2264
        %v2273 = vunpack.c.l.b16 %v2265
        %v2274 = vunpack.c.l.b16 %v2266
        %v2275 = vunpack.c.l.b16 %v2267
        %v2276 = vunpack.c.l.b16 %v2268
        %v2277 = vunpack.c.l.b16 %v2269
        %v2278 = vsel %vm1200, %v2271, %v2270
        %v2279 = vsel %vm1188, %v2272, %v2278
        %v2280 = vsel %vm1190, %v2273, %v2279
        %v2281 = vsel %vm1192, %v2274, %v2280
        %v2282 = vsel %vm1194, %v2275, %v2281
        %v2283 = vsel %vm1196, %v2276, %v2282
        %v2284 = vsel %vm1198, %v2277, %v2283
        %v2285 = vpack.c.b16 %v2284, %v2284
        %2287 = vst [vmem:[%s286] sm:$0xf] %v2285
        %s2288 = sand.u32 %s182, 1
        %s2289 = scalar_lea.sflag [#allocation4], %s2288
        %s2290 = sand.u32 %s182, 1
        %s2291 = smul.addr %s2290, 4
        %s2292 = scalar_lea.vmem [#allocation5], %s2291
        // Predicated region
        $region53: #{tpu_custom_call.1} parent=47 // pred_check
          %p2293 = pneg %p192
        $region54: #{tpu_custom_call.1} parent=47 // pred_check_branch
          %2295 = sbr.rel (%p2293) target = $region56
        $region55: #{tpu_custom_call.1} parent=47 // pred_region
          %s2297 = ssub.s32 64, 64
          %2298 = vsyncadd %s2289, %s2297
          %s2299 = smul.addr %s22, 64
          %s2300 = scalar_lea.hbm %s7, %s2299
          %s2302 = sshll.u32 %s2292, 4
          %s2303 = int_to_ptr.vmem [resolvable:$true] %s2302
          %2305 = dma.vmem_to_hbm [thread:$0]  %s2303, 64, %s2300, %s2289
        $region56: #{tpu_custom_call.1} parent=47 // pred_fallthru
          _
      $region48: #{tpu_custom_call.1} parent=5 // pred_fallthru
        _
      %p2306 = scmp.le.s32.totalorder 2, %s17
      // Predicated region
      $region57: #{tpu_custom_call.1} parent=5 // pred_check
        %p2307 = pneg %p2306
      $region58: #{tpu_custom_call.1} parent=5 // pred_check_branch
        %2309 = sbr.rel (%p2307) target = $region60
      $region59: #{tpu_custom_call.1} parent=5 // pred_region
        %s2310 = ssub.s32 %s17, 2
        // Predicated region
        $region61: #{tpu_custom_call.1} parent=59 // pred_check
          %p2311 = pneg %p198
        $region62: #{tpu_custom_call.1} parent=59 // pred_check_branch
          %2313 = sbr.rel (%p2311) target = $region64
        $region63: #{tpu_custom_call.1} parent=59 // pred_region
          %s2314 = sand.u32 %s183, 1
          %s2315 = scalar_lea.sflag [#allocation4], %s2314
          %s2316 = sand.u32 %s183, 1
          %s2317 = smul.addr %s2316, 4
          %s2318 = scalar_lea.vmem [#allocation5], %s2317
          %2319 = dma.done %s2315, 64
        $region64: #{tpu_custom_call.1} parent=59 // pred_fallthru
          _
      $region60: #{tpu_custom_call.1} parent=5 // pred_fallthru
        _
    $region6: #{tpu_custom_call.1} parent=1 // loop_footer
      %s21 = sadd.s32 1, %s17
    $region7: #{tpu_custom_call.1} parent=1 // loop_footer_branch
      %16 = sbr.rel target = $region3
    $region8: #{tpu_custom_call.1} parent=1 // loop_exit
      _
    %2320 = vsyncpa [#allocation3], 1
    %s2321 = scalar_lea.sflag [#allocation3], 1
    %2322 = vsyncpa %s2321, 1
    %2323 = vsyncpa [#allocation4], 1
    %s2324 = scalar_lea.sflag [#allocation4], 1
    %2325 = vsyncpa %s2324, 1

</llo_original>
